<compile_context>
chip_gen: v7x
topology: tpu7x:2x2x1
jax: 0.10.0
libtpu: 0.0.40
codegen_flags: <defaults>
</compile_context>

<pallas_src>
import functools

import jax
import jax.numpy as jnp
import numpy as np
from jax.experimental import pallas as pl
from jax.experimental.pallas import tpu as pltpu

LEAKY_SLOPE = 0.01   # nn.LeakyReLU default negative_slope
BN_EPS = 1e-5        # nn.BatchNorm2d default eps


# ----------------------------------------------------------------------------
# Fused kernel (one grid step = one batch element)
# ----------------------------------------------------------------------------
def _up_cbr_kernel(x1_ref, x2_ref, upw_ref, scat_ref, bpair_ref, wmat_ref,
                   scale_ref, shift_ref, maskl_ref, maskr_ref,
                   o_ref, xflat_ref, *,
                   H1, H2, W2, Cmid_pad, Cin2, PT, PB, mm_dtype):
    # x1_ref:   (1, Cmid_pad*H1, W1)    pre-upsample feature map, channel-row major
    # x2_ref:   (1, Cmid_pad, H2*W2)    skip connection, lane-dense (C, H*W)
    # upw_ref:  (4, Cmid_pad*H1, 1)     per-(tap, channel-row) ConvTranspose scales
    # scat_ref: (4*W1, 2*W2)            0/1 scatter matrix (interleave + left pad)
    # bpair_ref:(Cmid_pad, 2*W2)        ConvTranspose bias over valid columns of a row pair
    # wmat_ref: (Cout, 9*Cin2)          conv weights, col = tap*Cin2 + band*Cmid_pad + c
    # scale_ref/shift_ref: (Cout, 1)    folded BN (+ conv bias) affine
    # maskl/maskr_ref: (1, H2*W2)       lane masks for the kw=0 / kw=2 taps
    # o_ref:    (1, Cout, H2*W2)        lane-dense output block
    # xflat_ref: VMEM (Cin2, L)         flat conv input: lead(1) + (H2+2) rows of W2 + tail(1)
    f32 = jnp.float32
    n_pix = H2 * W2
    L = (H2 + 2) * W2 + 2
    zeros = lambda r, c: jnp.zeros((r, c), f32)

    # ---- zero ONLY the regions that are not overwritten below (halos + up pad rows).
    xflat_ref[:, 0:1 + W2] = zeros(Cin2, 1 + W2)                  # lead + top halo row
    tail = 1 + (H2 + 1) * W2
    xflat_ref[:, tail:L] = zeros(Cin2, L - tail)                  # bottom halo row + tail
    if PT > 0:                                                    # up-band top pad rows
        xflat_ref[Cmid_pad:Cin2, 1 + W2:1 + (1 + PT) * W2] = zeros(Cmid_pad, PT * W2)
    if PB > 0:                                                    # up-band bottom pad rows
        st = 1 + (1 + PT + 2 * H1) * W2
        xflat_ref[Cmid_pad:Cin2, st:st + PB * W2] = zeros(Cmid_pad, PB * W2)

    # ---- x2 -> channel band 0: one wide, full-sublane store.
    xflat_ref[0:Cmid_pad, 1 + W2:1 + (H2 + 1) * W2] = x2_ref[0].astype(f32)

    # ---- depthwise ConvTranspose2d(k=2, s=2) -> channel band 1.
    #      One matmul against a constant scatter matrix does the 2x column interleave
    #      and the left (PL) padding; each output row of `pair` is two flat-contiguous
    #      image rows, so placement is H1 stores of width 2*W2.
    x1 = x1_ref[0].astype(f32)                                            # (Cmid_pad*H1, W1)
    lhs = jnp.concatenate([x1 * upw_ref[t] for t in range(4)], axis=1)    # (Cmid_pad*H1, 4*W1)
    pair = jnp.dot(lhs, scat_ref[...], preferred_element_type=f32)        # (Cmid_pad*H1, 2*W2)
    pair = pair.reshape(Cmid_pad, H1, 2 * W2) + bpair_ref[...][:, None, :]
    base = 1 + (1 + PT) * W2
    for h in range(H1):
        xflat_ref[Cmid_pad:Cin2,
                  base + 2 * h * W2:base + (2 * h + 2) * W2] = pair[:, h, :]

    # ---- 3x3 conv (stride 1, pad 1) as ONE lane-dense im2col matmul on the MXU.
    #      Tap (kh, kw) is the contiguous slice at offset kh*W2 + kw; the kw=0/2 taps
    #      read a wrapped neighbour-row element at the row edges, zeroed by lane masks.
    taps = []
    for kh in range(3):
        for kw in range(3):
            off = kh * W2 + kw
            tap = xflat_ref[:, off:off + n_pix]                           # (Cin2, n_pix)
            if kw == 0:
                tap = tap * maskl_ref[...]
            elif kw == 2:
                tap = tap * maskr_ref[...]
            taps.append(tap.astype(mm_dtype))
    patches = jnp.concatenate(taps, axis=0)                               # (9*Cin2, n_pix)
    acc = jnp.dot(wmat_ref[...].astype(mm_dtype), patches,
                  preferred_element_type=f32)                             # (Cout, n_pix)

    # ---- folded BatchNorm (+ conv bias) affine, LeakyReLU, one lane-dense store.
    z = acc * scale_ref[...] + shift_ref[...]
    z = jnp.where(z >= 0, z, LEAKY_SLOPE * z).astype(o_ref.dtype)
    o_ref[0, :, :] = z


# ----------------------------------------------------------------------------
# up_CBR forward (NCHW in / NCHW out, matching PyTorch)
# ----------------------------------------------------------------------------
def up_cbr_forward(params, x1_nchw, x2_nchw, *, mm_dtype=jnp.float32):
    B, Cmid, H1, W1 = x1_nchw.shape
    _, _, H2, W2 = x2_nchw.shape
    Cin = 2 * Cmid
    Cout = params["conv_w"].shape[3]
    dy, dx = H2 - 2 * H1, W2 - 2 * W1
    PT, PL = dy // 2, dx // 2                 # F.pad top/left (bottom/right implied)
    PB = dy - PT
    Cmid_pad = ((Cmid + 7) // 8) * 8          # sublane-aligned channel bands
    cpad = Cmid_pad - Cmid
    Cin2 = 2 * Cmid_pad
    n_pix = H2 * W2
    L = (H2 + 2) * W2 + 2

    # ---- constant / parameter preprocessing (hoisted out of the kernel) -----------
    # ConvTranspose2d per-channel tap scales, repeated per LHS row (channel-row major).
    wt = jnp.pad(jnp.transpose(params["up_w"].reshape(Cmid, 4), (1, 0)),
                 ((0, 0), (0, cpad)))                                     # (4, Cmid_pad)
    upw_rep = jnp.repeat(wt[:, :, None], H1, axis=2).reshape(4, Cmid_pad * H1, 1)
    # 0/1 scatter matrix: row (kh*2+kw)*W1 + w -> column kh*W2 + PL + 2*w + kw.
    scat = np.zeros((4 * W1, 2 * W2), np.float32)
    for kh in range(2):
        for kw in range(2):
            for wi in range(W1):
                scat[(kh * 2 + kw) * W1 + wi, kh * W2 + PL + 2 * wi + kw] = 1.0
    scat = jnp.asarray(scat)
    # ConvTranspose bias over the valid (non-padded) columns of an upsampled row pair.
    col = jnp.arange(2 * W2) % W2
    valid = ((col >= PL) & (col < PL + 2 * W1)).astype(jnp.float32)       # (2*W2,)
    upb = jnp.pad(params["up_b"], (0, cpad))
    b_pair = upb[:, None] * valid[None, :]                                # (Cmid_pad, 2*W2)
    # Conv weights -> (Cout, 9*Cin2): tap-major, band-major, channel-minor, with zero
    # columns for the sublane-alignment pad channels.
    cw = jnp.transpose(params["conv_w"], (3, 0, 1, 2)).reshape(Cout, 3, 3, 2, Cmid)
    cw = jnp.pad(cw, ((0, 0), (0, 0), (0, 0), (0, 0), (0, cpad)))
    wmat = cw.reshape(Cout, 9 * Cin2)
    # Folded BatchNorm (+ conv bias).  Eval-mode (running stats) semantics.
    scale = params["bn_gamma"] / jnp.sqrt(params["bn_var"] + BN_EPS)
    shift = params["bn_beta"] - params["bn_mean"] * scale + params["conv_b"] * scale
    scale = scale.reshape(Cout, 1)
    shift = shift.reshape(Cout, 1)
    # Lane masks fixing the row-edge wraparound of the kw=0 / kw=2 conv taps.
    pos = jnp.arange(n_pix) % W2
    mask_l = (pos != 0).astype(jnp.float32).reshape(1, n_pix)
    mask_r = (pos != W2 - 1).astype(jnp.float32).reshape(1, n_pix)

    # ---- lane-dense kernel I/O: (B, C, H*W) views (free, contiguous reshapes) ------
    x1r = jnp.pad(x1_nchw, ((0, 0), (0, cpad), (0, 0), (0, 0))).reshape(B, Cmid_pad * H1, W1)
    x2r = jnp.pad(x2_nchw, ((0, 0), (0, cpad), (0, 0), (0, 0))).reshape(B, Cmid_pad, n_pix)

    kernel = functools.partial(_up_cbr_kernel, H1=H1, H2=H2, W2=W2,
                               Cmid_pad=Cmid_pad, Cin2=Cin2, PT=PT, PB=PB,
                               mm_dtype=mm_dtype)

    cost = pl.CostEstimate(
        flops=int(2 * B * (Cout * 9 * Cin * n_pix + Cmid * H1 * 4 * W1 * 2 * W2)),
        transcendentals=0,
        bytes_accessed=int(4 * (x1_nchw.size + x2_nchw.size + B * Cout * n_pix
                                + Cout * 9 * Cin + 4 * Cmid + 2 * Cout)))

    # TODO(synk): for realistic UNet widths (Cin>=128, 256x256 maps) add a spatial
    # row-tile grid axis (with a halo) and/or fold a batch tile into the matmul N dim
    # so v7x's 64 MiB VMEM budget holds, both v7x TCs stay busy at small B, and the
    # per-step overhead on single-TC v5e/v6e is amortized; unnecessary at these shapes.
    out_flat = pl.pallas_call(
        kernel,
        out_shape=jax.ShapeDtypeStruct((B, Cout, n_pix), x2_nchw.dtype),
        grid_spec=pltpu.PrefetchScalarGridSpec(
            num_scalar_prefetch=0,
            grid=(B,),
            in_specs=[
                pl.BlockSpec((1, Cmid_pad * H1, W1), lambda b: (b, 0, 0)),
                pl.BlockSpec((1, Cmid_pad, n_pix), lambda b: (b, 0, 0)),
                pl.BlockSpec((4, Cmid_pad * H1, 1), lambda b: (0, 0, 0)),
                pl.BlockSpec((4 * W1, 2 * W2), lambda b: (0, 0)),
                pl.BlockSpec((Cmid_pad, 2 * W2), lambda b: (0, 0)),
                pl.BlockSpec((Cout, 9 * Cin2), lambda b: (0, 0)),
                pl.BlockSpec((Cout, 1), lambda b: (0, 0)),
                pl.BlockSpec((Cout, 1), lambda b: (0, 0)),
                pl.BlockSpec((1, n_pix), lambda b: (0, 0)),
                pl.BlockSpec((1, n_pix), lambda b: (0, 0)),
            ],
            out_specs=pl.BlockSpec((1, Cout, n_pix), lambda b: (b, 0, 0)),
            scratch_shapes=[pltpu.VMEM((Cin2, L), jnp.float32)],
        ),
        compiler_params=pltpu.CompilerParams(dimension_semantics=("parallel",)),
        cost_estimate=cost,
    )(x1r, x2r, upw_rep, scat, b_pair, wmat, scale, shift, mask_l, mask_r)

    return out_flat.reshape(B, Cout, H2, W2)


# ----------------------------------------------------------------------------
# Pure-JAX reference for validation
# ----------------------------------------------------------------------------
def reference_forward(params, x1_nchw, x2_nchw):
    x1 = jnp.transpose(x1_nchw, (0, 2, 3, 1))
    x2 = jnp.transpose(x2_nchw, (0, 2, 3, 1))
    B, H1, W1, C = x1.shape
    wt = jnp.transpose(params["up_w"], (1, 2, 0))               # (2,2,C)
    t = x1[:, :, None, :, None, :] * wt[None, None, :, None, :, :]
    up = t.reshape(B, 2 * H1, 2 * W1, C) + params["up_b"]
    dy = x2.shape[1] - up.shape[1]
    dx = x2.shape[2] - up.shape[2]
    up = jnp.pad(up, ((0, 0), (dy // 2, dy - dy // 2),
                      (dx // 2, dx - dx // 2), (0, 0)))
    x = jnp.concatenate([x2, up], axis=-1)
    y = jax.lax.conv_general_dilated(
        x, params["conv_w"], window_strides=(1, 1), padding=((1, 1), (1, 1)),
        dimension_numbers=("NHWC", "HWIO", "NHWC"),
        precision=jax.lax.Precision.HIGHEST)
    scale = params["bn_gamma"] / jnp.sqrt(params["bn_var"] + BN_EPS)
    shift = params["bn_beta"] - params["bn_mean"] * scale + params["conv_b"] * scale
    y = y * scale + shift
    y = jnp.where(y >= 0, y, LEAKY_SLOPE * y)
    return jnp.transpose(y, (0, 3, 1, 2))


if __name__ == "__main__":
    key = jax.random.PRNGKey(0)
    B = 2
    in_ch, out_ch = 8, 8
    Cmid = in_ch // 2          # channels of x1/x2 (UNet mode)
    H1 = W1 = 8                # x1 spatial (pre-upsample)
    H2 = W2 = 16               # x2 spatial

    ks = jax.random.split(key, 10)
    x1 = jax.random.normal(ks[0], (B, Cmid, H1, W1), jnp.float32)
    x2 = jax.random.normal(ks[1], (B, Cmid, H2, W2), jnp.float32)

    params = dict(
        up_w=0.5 + 0.1 * jax.random.normal(ks[2], (Cmid, 2, 2), jnp.float32),
        up_b=0.1 * jax.random.normal(ks[3], (Cmid,), jnp.float32),
        conv_w=0.1 * jax.random.normal(ks[4], (3, 3, in_ch, out_ch), jnp.float32),
        conv_b=0.1 * jax.random.normal(ks[5], (out_ch,), jnp.float32),
        bn_gamma=1.0 + 0.1 * jax.random.normal(ks[6], (out_ch,), jnp.float32),
        bn_beta=0.1 * jax.random.normal(ks[7], (out_ch,), jnp.float32),
        bn_mean=0.1 * jax.random.normal(ks[8], (out_ch,), jnp.float32),
        bn_var=0.5 + jax.random.uniform(ks[9], (out_ch,), jnp.float32),
    )

    ref = jax.block_until_ready(reference_forward(params, x1, x2))

    # f32 MXU operands: tight tolerance.
    out = jax.block_until_ready(jax.jit(up_cbr_forward)(params, x1, x2))
    assert out.shape == (B, out_ch, H2, W2), out.shape
    np.testing.assert_allclose(np.asarray(out), np.asarray(ref),
                               rtol=2e-3, atol=2e-3)

    # bf16 MXU operands (f32 accumulator): looser tolerance for bf16 rounding.
    out_bf16 = jax.block_until_ready(
        jax.jit(functools.partial(up_cbr_forward, mm_dtype=jnp.bfloat16))(params, x1, x2))
    np.testing.assert_allclose(np.asarray(out_bf16), np.asarray(ref),
                               rtol=5e-2, atol=5e-2)

    print("KERNEL_OK")
</pallas_src>

<mosaic_0001>
module attributes {stable_mosaic.version = 11 : i64} {
  func.func @_up_cbr_kernel(%arg0: i32, %arg1: memref<1x64x8xf32, #tpu.memory_space<vmem>>, %arg2: memref<1x8x256xf32, #tpu.memory_space<vmem>>, %arg3: memref<4x64x1xf32, #tpu.memory_space<vmem>>, %arg4: memref<32x32xf32, #tpu.memory_space<vmem>>, %arg5: memref<8x32xf32, #tpu.memory_space<vmem>>, %arg6: memref<8x144xf32, #tpu.memory_space<vmem>>, %arg7: memref<8x1xf32, #tpu.memory_space<vmem>>, %arg8: memref<8x1xf32, #tpu.memory_space<vmem>>, %arg9: memref<1x256xf32, #tpu.memory_space<vmem>>, %arg10: memref<1x256xf32, #tpu.memory_space<vmem>>, %arg11: memref<1x8x256xf32, #tpu.memory_space<vmem>>, %arg12: memref<16x290xf32, #tpu.memory_space<vmem>>) attributes {dimension_semantics = [#tpu.dimension_semantics<parallel>], iteration_bounds = array<i64: 2>, scalar_prefetch = 0 : i64, scratch_operands = 1 : i64, tpu.core_type = #tpu.core_type<tc>, window_params = [{transform_indices = @transform_0, window_bounds = array<i64: 1, 64, 8>}, {transform_indices = @transform_1, window_bounds = array<i64: 1, 8, 256>}, {pipeline_mode = #tpu.pipeline_mode<synchronous>, transform_indices = @transform_2, window_bounds = array<i64: 4, 64, 1>}, {pipeline_mode = #tpu.pipeline_mode<synchronous>, transform_indices = @transform_3, window_bounds = array<i64: 32, 32>}, {pipeline_mode = #tpu.pipeline_mode<synchronous>, transform_indices = @transform_4, window_bounds = array<i64: 8, 32>}, {pipeline_mode = #tpu.pipeline_mode<synchronous>, transform_indices = @transform_5, window_bounds = array<i64: 8, 144>}, {pipeline_mode = #tpu.pipeline_mode<synchronous>, transform_indices = @transform_6, window_bounds = array<i64: 8, 1>}, {pipeline_mode = #tpu.pipeline_mode<synchronous>, transform_indices = @transform_7, window_bounds = array<i64: 8, 1>}, {pipeline_mode = #tpu.pipeline_mode<synchronous>, transform_indices = @transform_8, window_bounds = array<i64: 1, 256>}, {pipeline_mode = #tpu.pipeline_mode<synchronous>, transform_indices = @transform_9, window_bounds = array<i64: 1, 256>}, {transform_indices = @transform_10, window_bounds = array<i64: 1, 8, 256>}]} {
    %cst = arith.constant 0.000000e+00 : f32
    %0 = vector.broadcast %cst : f32 to vector<16x17xf32>
    %c0 = arith.constant 0 : index
    %c0_0 = arith.constant 0 : index
    %1 = vector.load %arg12[%c0, %c0_0] : memref<16x290xf32, #tpu.memory_space<vmem>>, vector<16x17xf32>
    tpu.vector_store %arg12[%c0, %c0_0], %0 {strides = array<i32>} : memref<16x290xf32, #tpu.memory_space<vmem>>, vector<16x17xf32>,
    %cst_1 = arith.constant 0.000000e+00 : f32
    %2 = vector.broadcast %cst_1 : f32 to vector<16x17xf32>
    %c0_2 = arith.constant 0 : index
    %c273 = arith.constant 273 : index
    %3 = vector.load %arg12[%c0_2, %c273] : memref<16x290xf32, #tpu.memory_space<vmem>>, vector<16x17xf32>
    tpu.vector_store %arg12[%c0_2, %c273], %2 {strides = array<i32>} : memref<16x290xf32, #tpu.memory_space<vmem>>, vector<16x17xf32>,
    %c0_3 = arith.constant 0 : index
    %c0_4 = arith.constant 0 : index
    %c0_5 = arith.constant 0 : index
    %4 = vector.load %arg2[%c0_3, %c0_4, %c0_5] : memref<1x8x256xf32, #tpu.memory_space<vmem>>, vector<1x8x256xf32>
    %5 = vector.shape_cast %4 : vector<1x8x256xf32> to vector<8x256xf32>
    %c0_6 = arith.constant 0 : index
    %c17 = arith.constant 17 : index
    %6 = vector.load %arg12[%c0_6, %c17] : memref<16x290xf32, #tpu.memory_space<vmem>>, vector<8x256xf32>
    tpu.vector_store %arg12[%c0_6, %c17], %5 {strides = array<i32>} : memref<16x290xf32, #tpu.memory_space<vmem>>, vector<8x256xf32>,
    %c0_7 = arith.constant 0 : index
    %c0_8 = arith.constant 0 : index
    %c0_9 = arith.constant 0 : index
    %7 = vector.load %arg1[%c0_7, %c0_8, %c0_9] : memref<1x64x8xf32, #tpu.memory_space<vmem>>, vector<1x64x8xf32>
    %8 = vector.shape_cast %7 : vector<1x64x8xf32> to vector<64x8xf32>
    %c0_10 = arith.constant 0 : index
    %c0_11 = arith.constant 0 : index
    %c0_12 = arith.constant 0 : index
    %9 = vector.load %arg3[%c0_10, %c0_11, %c0_12] : memref<4x64x1xf32, #tpu.memory_space<vmem>>, vector<1x64x1xf32>
    %10 = vector.shape_cast %9 : vector<1x64x1xf32> to vector<64x1xf32>
    %11 = vector.broadcast %10 : vector<64x1xf32> to vector<64x8xf32>
    %12 = arith.mulf %8, %11 : vector<64x8xf32>
    %c1 = arith.constant 1 : index
    %c0_13 = arith.constant 0 : index
    %c0_14 = arith.constant 0 : index
    %13 = vector.load %arg3[%c1, %c0_13, %c0_14] : memref<4x64x1xf32, #tpu.memory_space<vmem>>, vector<1x64x1xf32>
    %14 = vector.shape_cast %13 : vector<1x64x1xf32> to vector<64x1xf32>
    %15 = vector.broadcast %14 : vector<64x1xf32> to vector<64x8xf32>
    %16 = arith.mulf %8, %15 : vector<64x8xf32>
    %c2 = arith.constant 2 : index
    %c0_15 = arith.constant 0 : index
    %c0_16 = arith.constant 0 : index
    %17 = vector.load %arg3[%c2, %c0_15, %c0_16] : memref<4x64x1xf32, #tpu.memory_space<vmem>>, vector<1x64x1xf32>
    %18 = vector.shape_cast %17 : vector<1x64x1xf32> to vector<64x1xf32>
    %19 = vector.broadcast %18 : vector<64x1xf32> to vector<64x8xf32>
    %20 = arith.mulf %8, %19 : vector<64x8xf32>
    %c3 = arith.constant 3 : index
    %c0_17 = arith.constant 0 : index
    %c0_18 = arith.constant 0 : index
    %21 = vector.load %arg3[%c3, %c0_17, %c0_18] : memref<4x64x1xf32, #tpu.memory_space<vmem>>, vector<1x64x1xf32>
    %22 = vector.shape_cast %21 : vector<1x64x1xf32> to vector<64x1xf32>
    %23 = vector.broadcast %22 : vector<64x1xf32> to vector<64x8xf32>
    %24 = arith.mulf %8, %23 : vector<64x8xf32>
    %25 = tpu.concatenate %12, %16, %20, %24 in 1 : vector<64x8xf32>, vector<64x8xf32>, vector<64x8xf32>, vector<64x8xf32> -> vector<64x32xf32>
    %c0_19 = arith.constant 0 : index
    %c0_20 = arith.constant 0 : index
    %26 = vector.load %arg4[%c0_19, %c0_20] : memref<32x32xf32, #tpu.memory_space<vmem>>, vector<32x32xf32>
    %cst_21 = arith.constant dense<0.000000e+00> : vector<64x32xf32>
    %27 = tpu.matmul %25, %26, %cst_21 {dimension_numbers = #tpu.dot_dimension_numbers<[1], [0], [0], [1], [0, 0, 1, 1], [], []>} : vector<64x32xf32>, vector<32x32xf32>, vector<64x32xf32> -> vector<64x32xf32>
    %28 = vector.shape_cast %27 : vector<64x32xf32> to vector<8x8x32xf32>
    %c0_22 = arith.constant 0 : index
    %c0_23 = arith.constant 0 : index
    %29 = vector.load %arg5[%c0_22, %c0_23] : memref<8x32xf32, #tpu.memory_space<vmem>>, vector<8x32xf32>
    %30 = vector.shape_cast %29 : vector<8x32xf32> to vector<8x1x32xf32>
    %31 = vector.broadcast %30 : vector<8x1x32xf32> to vector<8x8x32xf32>
    %32 = arith.addf %28, %31 : vector<8x8x32xf32>
    %33 = vector.extract_strided_slice %32 {offsets = [0, 0, 0], sizes = [8, 1, 32], strides = [1, 1, 1]} : vector<8x8x32xf32> to vector<8x1x32xf32>
    %34 = vector.shape_cast %33 : vector<8x1x32xf32> to vector<8x32xf32>
    %c8 = arith.constant 8 : index
    %c17_24 = arith.constant 17 : index
    %35 = vector.load %arg12[%c8, %c17_24] : memref<16x290xf32, #tpu.memory_space<vmem>>, vector<8x32xf32>
    tpu.vector_store %arg12[%c8, %c17_24], %34 {strides = array<i32>} : memref<16x290xf32, #tpu.memory_space<vmem>>, vector<8x32xf32>,
    %36 = vector.extract_strided_slice %32 {offsets = [0, 1, 0], sizes = [8, 1, 32], strides = [1, 1, 1]} : vector<8x8x32xf32> to vector<8x1x32xf32>
    %37 = vector.shape_cast %36 : vector<8x1x32xf32> to vector<8x32xf32>
    %c8_25 = arith.constant 8 : index
    %c49 = arith.constant 49 : index
    %38 = vector.load %arg12[%c8_25, %c49] : memref<16x290xf32, #tpu.memory_space<vmem>>, vector<8x32xf32>
    tpu.vector_store %arg12[%c8_25, %c49], %37 {strides = array<i32>} : memref<16x290xf32, #tpu.memory_space<vmem>>, vector<8x32xf32>,
    %39 = vector.extract_strided_slice %32 {offsets = [0, 2, 0], sizes = [8, 1, 32], strides = [1, 1, 1]} : vector<8x8x32xf32> to vector<8x1x32xf32>
    %40 = vector.shape_cast %39 : vector<8x1x32xf32> to vector<8x32xf32>
    %c8_26 = arith.constant 8 : index
    %c81 = arith.constant 81 : index
    %41 = vector.load %arg12[%c8_26, %c81] : memref<16x290xf32, #tpu.memory_space<vmem>>, vector<8x32xf32>
    tpu.vector_store %arg12[%c8_26, %c81], %40 {strides = array<i32>} : memref<16x290xf32, #tpu.memory_space<vmem>>, vector<8x32xf32>,
    %42 = vector.extract_strided_slice %32 {offsets = [0, 3, 0], sizes = [8, 1, 32], strides = [1, 1, 1]} : vector<8x8x32xf32> to vector<8x1x32xf32>
    %43 = vector.shape_cast %42 : vector<8x1x32xf32> to vector<8x32xf32>
    %c8_27 = arith.constant 8 : index
    %c113 = arith.constant 113 : index
    %44 = vector.load %arg12[%c8_27, %c113] : memref<16x290xf32, #tpu.memory_space<vmem>>, vector<8x32xf32>
    tpu.vector_store %arg12[%c8_27, %c113], %43 {strides = array<i32>} : memref<16x290xf32, #tpu.memory_space<vmem>>, vector<8x32xf32>,
    %45 = vector.extract_strided_slice %32 {offsets = [0, 4, 0], sizes = [8, 1, 32], strides = [1, 1, 1]} : vector<8x8x32xf32> to vector<8x1x32xf32>
    %46 = vector.shape_cast %45 : vector<8x1x32xf32> to vector<8x32xf32>
    %c8_28 = arith.constant 8 : index
    %c145 = arith.constant 145 : index
    %47 = vector.load %arg12[%c8_28, %c145] : memref<16x290xf32, #tpu.memory_space<vmem>>, vector<8x32xf32>
    tpu.vector_store %arg12[%c8_28, %c145], %46 {strides = array<i32>} : memref<16x290xf32, #tpu.memory_space<vmem>>, vector<8x32xf32>,
    %48 = vector.extract_strided_slice %32 {offsets = [0, 5, 0], sizes = [8, 1, 32], strides = [1, 1, 1]} : vector<8x8x32xf32> to vector<8x1x32xf32>
    %49 = vector.shape_cast %48 : vector<8x1x32xf32> to vector<8x32xf32>
    %c8_29 = arith.constant 8 : index
    %c177 = arith.constant 177 : index
    %50 = vector.load %arg12[%c8_29, %c177] : memref<16x290xf32, #tpu.memory_space<vmem>>, vector<8x32xf32>
    tpu.vector_store %arg12[%c8_29, %c177], %49 {strides = array<i32>} : memref<16x290xf32, #tpu.memory_space<vmem>>, vector<8x32xf32>,
    %51 = vector.extract_strided_slice %32 {offsets = [0, 6, 0], sizes = [8, 1, 32], strides = [1, 1, 1]} : vector<8x8x32xf32> to vector<8x1x32xf32>
    %52 = vector.shape_cast %51 : vector<8x1x32xf32> to vector<8x32xf32>
    %c8_30 = arith.constant 8 : index
    %c209 = arith.constant 209 : index
    %53 = vector.load %arg12[%c8_30, %c209] : memref<16x290xf32, #tpu.memory_space<vmem>>, vector<8x32xf32>
    tpu.vector_store %arg12[%c8_30, %c209], %52 {strides = array<i32>} : memref<16x290xf32, #tpu.memory_space<vmem>>, vector<8x32xf32>,
    %54 = vector.extract_strided_slice %32 {offsets = [0, 7, 0], sizes = [8, 1, 32], strides = [1, 1, 1]} : vector<8x8x32xf32> to vector<8x1x32xf32>
    %55 = vector.shape_cast %54 : vector<8x1x32xf32> to vector<8x32xf32>
    %c8_31 = arith.constant 8 : index
    %c241 = arith.constant 241 : index
    %56 = vector.load %arg12[%c8_31, %c241] : memref<16x290xf32, #tpu.memory_space<vmem>>, vector<8x32xf32>
    tpu.vector_store %arg12[%c8_31, %c241], %55 {strides = array<i32>} : memref<16x290xf32, #tpu.memory_space<vmem>>, vector<8x32xf32>,
    %c0_32 = arith.constant 0 : index
    %c0_33 = arith.constant 0 : index
    %57 = vector.load %arg12[%c0_32, %c0_33] : memref<16x290xf32, #tpu.memory_space<vmem>>, vector<16x256xf32>
    %c0_34 = arith.constant 0 : index
    %c0_35 = arith.constant 0 : index
    %58 = vector.load %arg9[%c0_34, %c0_35] : memref<1x256xf32, #tpu.memory_space<vmem>>, vector<1x256xf32>
    %59 = vector.broadcast %58 : vector<1x256xf32> to vector<16x256xf32>
    %60 = arith.mulf %57, %59 : vector<16x256xf32>
    %c0_36 = arith.constant 0 : index
    %c1_37 = arith.constant 1 : index
    %61 = vector.load %arg12[%c0_36, %c1_37] : memref<16x290xf32, #tpu.memory_space<vmem>>, vector<16x256xf32>
    %c0_38 = arith.constant 0 : index
    %c2_39 = arith.constant 2 : index
    %62 = vector.load %arg12[%c0_38, %c2_39] : memref<16x290xf32, #tpu.memory_space<vmem>>, vector<16x256xf32>
    %c0_40 = arith.constant 0 : index
    %c0_41 = arith.constant 0 : index
    %63 = vector.load %arg10[%c0_40, %c0_41] : memref<1x256xf32, #tpu.memory_space<vmem>>, vector<1x256xf32>
    %64 = vector.broadcast %63 : vector<1x256xf32> to vector<16x256xf32>
    %65 = arith.mulf %62, %64 : vector<16x256xf32>
    %c0_42 = arith.constant 0 : index
    %c16 = arith.constant 16 : index
    %66 = vector.load %arg12[%c0_42, %c16] : memref<16x290xf32, #tpu.memory_space<vmem>>, vector<16x256xf32>
    %c0_43 = arith.constant 0 : index
    %c0_44 = arith.constant 0 : index
    %67 = vector.load %arg9[%c0_43, %c0_44] : memref<1x256xf32, #tpu.memory_space<vmem>>, vector<1x256xf32>
    %68 = vector.broadcast %67 : vector<1x256xf32> to vector<16x256xf32>
    %69 = arith.mulf %66, %68 : vector<16x256xf32>
    %c0_45 = arith.constant 0 : index
    %c17_46 = arith.constant 17 : index
    %70 = vector.load %arg12[%c0_45, %c17_46] : memref<16x290xf32, #tpu.memory_space<vmem>>, vector<16x256xf32>
    %c0_47 = arith.constant 0 : index
    %c18 = arith.constant 18 : index
    %71 = vector.load %arg12[%c0_47, %c18] : memref<16x290xf32, #tpu.memory_space<vmem>>, vector<16x256xf32>
    %c0_48 = arith.constant 0 : index
    %c0_49 = arith.constant 0 : index
    %72 = vector.load %arg10[%c0_48, %c0_49] : memref<1x256xf32, #tpu.memory_space<vmem>>, vector<1x256xf32>
    %73 = vector.broadcast %72 : vector<1x256xf32> to vector<16x256xf32>
    %74 = arith.mulf %71, %73 : vector<16x256xf32>
    %c0_50 = arith.constant 0 : index
    %c32 = arith.constant 32 : index
    %75 = vector.load %arg12[%c0_50, %c32] : memref<16x290xf32, #tpu.memory_space<vmem>>, vector<16x256xf32>
    %c0_51 = arith.constant 0 : index
    %c0_52 = arith.constant 0 : index
    %76 = vector.load %arg9[%c0_51, %c0_52] : memref<1x256xf32, #tpu.memory_space<vmem>>, vector<1x256xf32>
    %77 = vector.broadcast %76 : vector<1x256xf32> to vector<16x256xf32>
    %78 = arith.mulf %75, %77 : vector<16x256xf32>
    %c0_53 = arith.constant 0 : index
    %c33 = arith.constant 33 : index
    %79 = vector.load %arg12[%c0_53, %c33] : memref<16x290xf32, #tpu.memory_space<vmem>>, vector<16x256xf32>
    %c0_54 = arith.constant 0 : index
    %c34 = arith.constant 34 : index
    %80 = vector.load %arg12[%c0_54, %c34] : memref<16x290xf32, #tpu.memory_space<vmem>>, vector<16x256xf32>
    %c0_55 = arith.constant 0 : index
    %c0_56 = arith.constant 0 : index
    %81 = vector.load %arg10[%c0_55, %c0_56] : memref<1x256xf32, #tpu.memory_space<vmem>>, vector<1x256xf32>
    %82 = vector.broadcast %81 : vector<1x256xf32> to vector<16x256xf32>
    %83 = arith.mulf %80, %82 : vector<16x256xf32>
    %84 = tpu.concatenate %60, %61, %65, %69, %70, %74, %78, %79, %83 in 0 : vector<16x256xf32>, vector<16x256xf32>, vector<16x256xf32>, vector<16x256xf32>, vector<16x256xf32>, vector<16x256xf32>, vector<16x256xf32>, vector<16x256xf32>, vector<16x256xf32> -> vector<144x256xf32>
    %c0_57 = arith.constant 0 : index
    %c0_58 = arith.constant 0 : index
    %85 = vector.load %arg6[%c0_57, %c0_58] : memref<8x144xf32, #tpu.memory_space<vmem>>, vector<8x144xf32>
    %cst_59 = arith.constant dense<0.000000e+00> : vector<8x256xf32>
    %86 = tpu.matmul %85, %84, %cst_59 {dimension_numbers = #tpu.dot_dimension_numbers<[1], [0], [0], [1], [0, 0, 1, 1], [], []>} : vector<8x144xf32>, vector<144x256xf32>, vector<8x256xf32> -> vector<8x256xf32>
    %c0_60 = arith.constant 0 : index
    %c0_61 = arith.constant 0 : index
    %87 = vector.load %arg7[%c0_60, %c0_61] : memref<8x1xf32, #tpu.memory_space<vmem>>, vector<8x1xf32>
    %88 = vector.broadcast %87 : vector<8x1xf32> to vector<8x256xf32>
    %89 = arith.mulf %86, %88 : vector<8x256xf32>
    %c0_62 = arith.constant 0 : index
    %c0_63 = arith.constant 0 : index
    %90 = vector.load %arg8[%c0_62, %c0_63] : memref<8x1xf32, #tpu.memory_space<vmem>>, vector<8x1xf32>
    %91 = vector.broadcast %90 : vector<8x1xf32> to vector<8x256xf32>
    %92 = arith.addf %89, %91 : vector<8x256xf32>
    %cst_64 = arith.constant 0.000000e+00 : f32
    %93 = vector.broadcast %cst_64 : f32 to vector<8x256xf32>
    %94 = arith.cmpf oge, %92, %93 : vector<8x256xf32>
    %cst_65 = arith.constant 0.00999999977 : f32
    %95 = vector.broadcast %cst_65 : f32 to vector<8x256xf32>
    %96 = arith.mulf %95, %92 : vector<8x256xf32>
    %97 = arith.select %94, %92, %96 : vector<8x256xi1>, vector<8x256xf32>
    %c0_66 = arith.constant 0 : index
    %c0_67 = arith.constant 0 : index
    %c0_68 = arith.constant 0 : index
    %98 = vector.load %arg11[%c0_66, %c0_67, %c0_68] : memref<1x8x256xf32, #tpu.memory_space<vmem>>, vector<1x8x256xf32>
    %99 = vector.shape_cast %98 : vector<1x8x256xf32> to vector<8x256xf32>
    %100 = vector.shape_cast %97 : vector<8x256xf32> to vector<1x8x256xf32>
    tpu.vector_store %arg11[%c0_66, %c0_67, %c0_68], %100 {strides = array<i32>} : memref<1x8x256xf32, #tpu.memory_space<vmem>>, vector<1x8x256xf32>,
    return
  }
  func.func @transform_0(%arg0: i32) -> (i32, i32, i32) {
    %c0_i32 = arith.constant 0 : i32
    %c0_i32_0 = arith.constant 0 : i32
    %c0_i32_1 = arith.constant 0 : i32
    return %arg0, %c0_i32, %c0_i32_0 : i32, i32, i32
  }
  func.func @transform_1(%arg0: i32) -> (i32, i32, i32) {
    %c0_i32 = arith.constant 0 : i32
    %c0_i32_0 = arith.constant 0 : i32
    %c0_i32_1 = arith.constant 0 : i32
    return %arg0, %c0_i32, %c0_i32_0 : i32, i32, i32
  }
  func.func @transform_2(%arg0: i32) -> (i32, i32, i32) {
    %c0_i32 = arith.constant 0 : i32
    %c0_i32_0 = arith.constant 0 : i32
    %c0_i32_1 = arith.constant 0 : i32
    %c0_i32_2 = arith.constant 0 : i32
    return %c0_i32, %c0_i32_0, %c0_i32_1 : i32, i32, i32
  }
  func.func @transform_3(%arg0: i32) -> (i32, i32) {
    %c0_i32 = arith.constant 0 : i32
    %c0_i32_0 = arith.constant 0 : i32
    %c0_i32_1 = arith.constant 0 : i32
    return %c0_i32, %c0_i32_0 : i32, i32
  }
  func.func @transform_4(%arg0: i32) -> (i32, i32) {
    %c0_i32 = arith.constant 0 : i32
    %c0_i32_0 = arith.constant 0 : i32
    %c0_i32_1 = arith.constant 0 : i32
    return %c0_i32, %c0_i32_0 : i32, i32
  }
  func.func @transform_5(%arg0: i32) -> (i32, i32) {
    %c0_i32 = arith.constant 0 : i32
    %c0_i32_0 = arith.constant 0 : i32
    %c0_i32_1 = arith.constant 0 : i32
    return %c0_i32, %c0_i32_0 : i32, i32
  }
  func.func @transform_6(%arg0: i32) -> (i32, i32) {
    %c0_i32 = arith.constant 0 : i32
    %c0_i32_0 = arith.constant 0 : i32
    %c0_i32_1 = arith.constant 0 : i32
    return %c0_i32, %c0_i32_0 : i32, i32
  }
  func.func @transform_7(%arg0: i32) -> (i32, i32) {
    %c0_i32 = arith.constant 0 : i32
    %c0_i32_0 = arith.constant 0 : i32
    %c0_i32_1 = arith.constant 0 : i32
    return %c0_i32, %c0_i32_0 : i32, i32
  }
  func.func @transform_8(%arg0: i32) -> (i32, i32) {
    %c0_i32 = arith.constant 0 : i32
    %c0_i32_0 = arith.constant 0 : i32
    %c0_i32_1 = arith.constant 0 : i32
    return %c0_i32, %c0_i32_0 : i32, i32
  }
  func.func @transform_9(%arg0: i32) -> (i32, i32) {
    %c0_i32 = arith.constant 0 : i32
    %c0_i32_0 = arith.constant 0 : i32
    %c0_i32_1 = arith.constant 0 : i32
    return %c0_i32, %c0_i32_0 : i32, i32
  }
  func.func @transform_10(%arg0: i32) -> (i32, i32, i32) {
    %c0_i32 = arith.constant 0 : i32
    %c0_i32_0 = arith.constant 0 : i32
    %c0_i32_1 = arith.constant 0 : i32
    return %arg0, %c0_i32, %c0_i32_0 : i32, i32, i32
  }
}

</mosaic_0001>

<llo_original>
// kernel: up_cbr_forward.1
$region0: #{up_cbr_forward.1}
  #allocation0 [shape = 'u32[]', space=smem, size = 0x4, offset = 0x4, fixed_abs, tag = 'smem constant byte address 0x4 - core index']
  #allocation1 [shape = 'u32[144,128]{1,0:T(1,128)}', space=vmem, size = 0x12000, scoped, tag = 'internal scratch']
  #allocation2 [shape = 'f32[16,290]{1,0:T(8,128)}', space=vmem, size = 0x6000, scoped, tag = 'scratch operand']
  %s0 = inlined_call_operand.vmem [shape: f32[2,64,8], index: 0, kind: input, shape index: {}]
  %s1 = inlined_call_operand.vmem [shape: f32[2,8,256], index: 1, kind: input, shape index: {}]
  %s2 = inlined_call_operand.vmem [shape: f32[4,64,1], index: 2, kind: input, shape index: {}]
  %s3 = inlined_call_operand.vmem [shape: f32[32,32], index: 3, kind: input, shape index: {}]
  %s4 = inlined_call_operand.vmem [shape: f32[8,32], index: 4, kind: input, shape index: {}]
  %s5 = inlined_call_operand.vmem [shape: f32[8,144], index: 5, kind: input, shape index: {}]
  %s6 = inlined_call_operand.vmem [shape: f32[8,1], index: 6, kind: input, shape index: {}]
  %s7 = inlined_call_operand.vmem [shape: f32[8,1], index: 7, kind: input, shape index: {}]
  %s8 = inlined_call_operand.vmem [shape: f32[1,256], index: 8, kind: input, shape index: {}]
  %s9 = inlined_call_operand.vmem [shape: f32[1,256], index: 9, kind: input, shape index: {}]
  %s10 = inlined_call_operand.vmem [shape: f32[2,8,256], index: 10, kind: output, shape index: {}]
  %s11 = sld [smem:[#allocation0]]
  $region73: #{up_cbr_forward.1} parent=0
    _
  %s13 = ssub.s32 1, %s11
  %s14 = scalar_select 0, %s13, %s11
  loop: start=0, step=1, limit=4
  $region2: #{up_cbr_forward.1} parent=0 // loop_pre_header
    _
  $region3: #{up_cbr_forward.1} parent=0 // loop_header
    %s16 = sphi 0, %s20
    %p17 = scmp.ge.s32.totalorder %s16, 4
    %s26 = sphi 0, %s28
    %s29 = sphi 0, %s26
    %s30 = sphi 0, %s29
    %s46 = sphi 0, %s30
    %s52 = sphi 0, %s54
    %s55 = sphi 0, %s52
    %s56 = sphi 0, %s55
    %s72 = sphi 0, %s56
    %s76 = sphi 0, %s76
    %s78 = sphi 0, %s76
    %s79 = sphi 0, %s78
    %s93 = sphi 0, %s79
    %s97 = sphi 0, %s97
    %s99 = sphi 0, %s97
    %s100 = sphi 0, %s99
    %s114 = sphi 0, %s100
    %s118 = sphi 0, %s118
    %s120 = sphi 0, %s118
    %s121 = sphi 0, %s120
    %s135 = sphi 0, %s121
    %s139 = sphi 0, %s139
    %s141 = sphi 0, %s139
    %s142 = sphi 0, %s141
    %s156 = sphi 0, %s142
    %s160 = sphi 0, %s160
    %s162 = sphi 0, %s160
    %s163 = sphi 0, %s162
    %s177 = sphi 0, %s163
    %s181 = sphi 0, %s181
    %s183 = sphi 0, %s181
    %s184 = sphi 0, %s183
    %s198 = sphi 0, %s184
    %s202 = sphi 0, %s202
    %s204 = sphi 0, %s202
    %s205 = sphi 0, %s204
    %s219 = sphi 0, %s205
    %s223 = sphi 0, %s223
    %s225 = sphi 0, %s223
    %s226 = sphi 0, %s225
    %s240 = sphi 0, %s226
    %s246 = sphi 0, %s248
    %s249 = sphi 0, %s246
    %s250 = sphi 0, %s249
    %s266 = sphi 0, %s250
  $region4: #{up_cbr_forward.1} parent=0 // loop_header_branch
    %19 = sbr.rel (%p17) target = $region8
  $region5: #{up_cbr_forward.1} parent=0 // loop_body
    %s21 = ssub.s32 %s16, 1
    %s22 = ssub.s32 %s16, 2
    %s23 = sadd.s32 %s16, 1
    %s24 = ssub.s32 %s16, %s23
    %p25 = scmp.eq.s32.totalorder %s24, 0
    %s27 = sadd.s32 %s26, 1
    %s28 = scalar_select %p25, %s26, %s27
    %p31 = pneg %p25
    %p32 = scmp.eq.s32.totalorder %s16, 1
    %p33 = por %p31, %p32
    %p34 = scmp.ne.s32.totalorder %s26, %s29
    %p35 = scmp.eq.s32.totalorder %s16, 0
    %p36 = por %p34, %p35
    %p37 = scmp.ne.s32.totalorder %s26, %s29
    %p38 = scmp.eq.s32.totalorder %s21, 1
    %p39 = por %p37, %p38
    %p40 = scmp.ne.s32.totalorder %s29, %s30
    %p41 = scmp.eq.s32.totalorder %s21, 0
    %p42 = por %p40, %p41
    %p43 = scmp.ne.s32.totalorder %s29, %s30
    %p44 = scmp.eq.s32.totalorder %s22, 1
    %p45 = por %p43, %p44
    %p47 = scmp.ne.s32.totalorder %s30, %s46
    %p48 = scmp.eq.s32.totalorder %s22, 0
    %p49 = por %p47, %p48
    %s50 = ssub.s32 %s16, %s23
    %p51 = scmp.eq.s32.totalorder %s50, 0
    %s53 = sadd.s32 %s52, 1
    %s54 = scalar_select %p51, %s52, %s53
    %p57 = pneg %p51
    %p58 = scmp.eq.s32.totalorder %s16, 1
    %p59 = por %p57, %p58
    %p60 = scmp.ne.s32.totalorder %s52, %s55
    %p61 = scmp.eq.s32.totalorder %s16, 0
    %p62 = por %p60, %p61
    %p63 = scmp.ne.s32.totalorder %s52, %s55
    %p64 = scmp.eq.s32.totalorder %s21, 1
    %p65 = por %p63, %p64
    %p66 = scmp.ne.s32.totalorder %s55, %s56
    %p67 = scmp.eq.s32.totalorder %s21, 0
    %p68 = por %p66, %p67
    %p69 = scmp.ne.s32.totalorder %s55, %s56
    %p70 = scmp.eq.s32.totalorder %s22, 1
    %p71 = por %p69, %p70
    %p73 = scmp.ne.s32.totalorder %s56, %s72
    %p74 = scmp.eq.s32.totalorder %s22, 0
    %p75 = por %p73, %p74
    %s77 = sadd.s32 %s76, 1
    %p80 = scmp.eq.s32.totalorder %s16, 1
    %p81 = scmp.ne.s32.totalorder %s76, %s78
    %p82 = scmp.eq.s32.totalorder %s16, 0
    %p83 = por %p81, %p82
    %p84 = scmp.ne.s32.totalorder %s76, %s78
    %p85 = scmp.eq.s32.totalorder %s21, 1
    %p86 = por %p84, %p85
    %p87 = scmp.ne.s32.totalorder %s78, %s79
    %p88 = scmp.eq.s32.totalorder %s21, 0
    %p89 = por %p87, %p88
    %p90 = scmp.ne.s32.totalorder %s78, %s79
    %p91 = scmp.eq.s32.totalorder %s22, 1
    %p92 = por %p90, %p91
    %p94 = scmp.ne.s32.totalorder %s79, %s93
    %p95 = scmp.eq.s32.totalorder %s22, 0
    %p96 = por %p94, %p95
    %s98 = sadd.s32 %s97, 1
    %p101 = scmp.eq.s32.totalorder %s16, 1
    %p102 = scmp.ne.s32.totalorder %s97, %s99
    %p103 = scmp.eq.s32.totalorder %s16, 0
    %p104 = por %p102, %p103
    %p105 = scmp.ne.s32.totalorder %s97, %s99
    %p106 = scmp.eq.s32.totalorder %s21, 1
    %p107 = por %p105, %p106
    %p108 = scmp.ne.s32.totalorder %s99, %s100
    %p109 = scmp.eq.s32.totalorder %s21, 0
    %p110 = por %p108, %p109
    %p111 = scmp.ne.s32.totalorder %s99, %s100
    %p112 = scmp.eq.s32.totalorder %s22, 1
    %p113 = por %p111, %p112
    %p115 = scmp.ne.s32.totalorder %s100, %s114
    %p116 = scmp.eq.s32.totalorder %s22, 0
    %p117 = por %p115, %p116
    %s119 = sadd.s32 %s118, 1
    %p122 = scmp.eq.s32.totalorder %s16, 1
    %p123 = scmp.ne.s32.totalorder %s118, %s120
    %p124 = scmp.eq.s32.totalorder %s16, 0
    %p125 = por %p123, %p124
    %p126 = scmp.ne.s32.totalorder %s118, %s120
    %p127 = scmp.eq.s32.totalorder %s21, 1
    %p128 = por %p126, %p127
    %p129 = scmp.ne.s32.totalorder %s120, %s121
    %p130 = scmp.eq.s32.totalorder %s21, 0
    %p131 = por %p129, %p130
    %p132 = scmp.ne.s32.totalorder %s120, %s121
    %p133 = scmp.eq.s32.totalorder %s22, 1
    %p134 = por %p132, %p133
    %p136 = scmp.ne.s32.totalorder %s121, %s135
    %p137 = scmp.eq.s32.totalorder %s22, 0
    %p138 = por %p136, %p137
    %s140 = sadd.s32 %s139, 1
    %p143 = scmp.eq.s32.totalorder %s16, 1
    %p144 = scmp.ne.s32.totalorder %s139, %s141
    %p145 = scmp.eq.s32.totalorder %s16, 0
    %p146 = por %p144, %p145
    %p147 = scmp.ne.s32.totalorder %s139, %s141
    %p148 = scmp.eq.s32.totalorder %s21, 1
    %p149 = por %p147, %p148
    %p150 = scmp.ne.s32.totalorder %s141, %s142
    %p151 = scmp.eq.s32.totalorder %s21, 0
    %p152 = por %p150, %p151
    %p153 = scmp.ne.s32.totalorder %s141, %s142
    %p154 = scmp.eq.s32.totalorder %s22, 1
    %p155 = por %p153, %p154
    %p157 = scmp.ne.s32.totalorder %s142, %s156
    %p158 = scmp.eq.s32.totalorder %s22, 0
    %p159 = por %p157, %p158
    %s161 = sadd.s32 %s160, 1
    %p164 = scmp.eq.s32.totalorder %s16, 1
    %p165 = scmp.ne.s32.totalorder %s160, %s162
    %p166 = scmp.eq.s32.totalorder %s16, 0
    %p167 = por %p165, %p166
    %p168 = scmp.ne.s32.totalorder %s160, %s162
    %p169 = scmp.eq.s32.totalorder %s21, 1
    %p170 = por %p168, %p169
    %p171 = scmp.ne.s32.totalorder %s162, %s163
    %p172 = scmp.eq.s32.totalorder %s21, 0
    %p173 = por %p171, %p172
    %p174 = scmp.ne.s32.totalorder %s162, %s163
    %p175 = scmp.eq.s32.totalorder %s22, 1
    %p176 = por %p174, %p175
    %p178 = scmp.ne.s32.totalorder %s163, %s177
    %p179 = scmp.eq.s32.totalorder %s22, 0
    %p180 = por %p178, %p179
    %s182 = sadd.s32 %s181, 1
    %p185 = scmp.eq.s32.totalorder %s16, 1
    %p186 = scmp.ne.s32.totalorder %s181, %s183
    %p187 = scmp.eq.s32.totalorder %s16, 0
    %p188 = por %p186, %p187
    %p189 = scmp.ne.s32.totalorder %s181, %s183
    %p190 = scmp.eq.s32.totalorder %s21, 1
    %p191 = por %p189, %p190
    %p192 = scmp.ne.s32.totalorder %s183, %s184
    %p193 = scmp.eq.s32.totalorder %s21, 0
    %p194 = por %p192, %p193
    %p195 = scmp.ne.s32.totalorder %s183, %s184
    %p196 = scmp.eq.s32.totalorder %s22, 1
    %p197 = por %p195, %p196
    %p199 = scmp.ne.s32.totalorder %s184, %s198
    %p200 = scmp.eq.s32.totalorder %s22, 0
    %p201 = por %p199, %p200
    %s203 = sadd.s32 %s202, 1
    %p206 = scmp.eq.s32.totalorder %s16, 1
    %p207 = scmp.ne.s32.totalorder %s202, %s204
    %p208 = scmp.eq.s32.totalorder %s16, 0
    %p209 = por %p207, %p208
    %p210 = scmp.ne.s32.totalorder %s202, %s204
    %p211 = scmp.eq.s32.totalorder %s21, 1
    %p212 = por %p210, %p211
    %p213 = scmp.ne.s32.totalorder %s204, %s205
    %p214 = scmp.eq.s32.totalorder %s21, 0
    %p215 = por %p213, %p214
    %p216 = scmp.ne.s32.totalorder %s204, %s205
    %p217 = scmp.eq.s32.totalorder %s22, 1
    %p218 = por %p216, %p217
    %p220 = scmp.ne.s32.totalorder %s205, %s219
    %p221 = scmp.eq.s32.totalorder %s22, 0
    %p222 = por %p220, %p221
    %s224 = sadd.s32 %s223, 1
    %p227 = scmp.eq.s32.totalorder %s16, 1
    %p228 = scmp.ne.s32.totalorder %s223, %s225
    %p229 = scmp.eq.s32.totalorder %s16, 0
    %p230 = por %p228, %p229
    %p231 = scmp.ne.s32.totalorder %s223, %s225
    %p232 = scmp.eq.s32.totalorder %s21, 1
    %p233 = por %p231, %p232
    %p234 = scmp.ne.s32.totalorder %s225, %s226
    %p235 = scmp.eq.s32.totalorder %s21, 0
    %p236 = por %p234, %p235
    %p237 = scmp.ne.s32.totalorder %s225, %s226
    %p238 = scmp.eq.s32.totalorder %s22, 1
    %p239 = por %p237, %p238
    %p241 = scmp.ne.s32.totalorder %s226, %s240
    %p242 = scmp.eq.s32.totalorder %s22, 0
    %p243 = por %p241, %p242
    %s244 = ssub.s32 %s16, %s23
    %p245 = scmp.eq.s32.totalorder %s244, 0
    %s247 = sadd.s32 %s246, 1
    %s248 = scalar_select %p245, %s246, %s247
    %p251 = pneg %p245
    %p252 = scmp.eq.s32.totalorder %s16, 1
    %p253 = por %p251, %p252
    %p254 = scmp.ne.s32.totalorder %s246, %s249
    %p255 = scmp.eq.s32.totalorder %s16, 0
    %p256 = por %p254, %p255
    %p257 = scmp.ne.s32.totalorder %s246, %s249
    %p258 = scmp.eq.s32.totalorder %s21, 1
    %p259 = por %p257, %p258
    %p260 = scmp.ne.s32.totalorder %s249, %s250
    %p261 = scmp.eq.s32.totalorder %s21, 0
    %p262 = por %p260, %p261
    %p263 = scmp.ne.s32.totalorder %s249, %s250
    %p264 = scmp.eq.s32.totalorder %s22, 1
    %p265 = por %p263, %p264
    %p267 = scmp.ne.s32.totalorder %s250, %s266
    %p268 = scmp.eq.s32.totalorder %s22, 0
    %p269 = por %p267, %p268
    %p270 = scmp.le.s32.totalorder 1, %s16
    %p271 = scmp.lt.s32.totalorder %s16, 3
    %p272 = pnand %p270, %p271
    %p273 = pneg %p272
    // Predicated region
    $region9: #{up_cbr_forward.1} parent=5 // pred_check
      _
    $region10: #{up_cbr_forward.1} parent=5 // pred_check_branch
      %275 = sbr.rel (%p272) target = $region12
    $region11: #{up_cbr_forward.1} parent=5 // pred_region
      %s276 = ssub.s32 %s16, 1
      // Predicated region
      $region13: #{up_cbr_forward.1} parent=11 // pred_check
        %p277 = pneg %p89
      $region14: #{up_cbr_forward.1} parent=11 // pred_check_branch
        %279 = sbr.rel (%p277) target = $region16
      $region15: #{up_cbr_forward.1} parent=11 // pred_region
        _
      $region16: #{up_cbr_forward.1} parent=11 // pred_fallthru
        _
      // Predicated region
      $region17: #{up_cbr_forward.1} parent=11 // pred_check
        %p280 = pneg %p110
      $region18: #{up_cbr_forward.1} parent=11 // pred_check_branch
        %282 = sbr.rel (%p280) target = $region20
      $region19: #{up_cbr_forward.1} parent=11 // pred_region
        _
      $region20: #{up_cbr_forward.1} parent=11 // pred_fallthru
        _
      // Predicated region
      $region21: #{up_cbr_forward.1} parent=11 // pred_check
        %p283 = pneg %p131
      $region22: #{up_cbr_forward.1} parent=11 // pred_check_branch
        %285 = sbr.rel (%p283) target = $region24
      $region23: #{up_cbr_forward.1} parent=11 // pred_region
        _
      $region24: #{up_cbr_forward.1} parent=11 // pred_fallthru
        _
      // Predicated region
      $region25: #{up_cbr_forward.1} parent=11 // pred_check
        %p286 = pneg %p152
      $region26: #{up_cbr_forward.1} parent=11 // pred_check_branch
        %288 = sbr.rel (%p286) target = $region28
      $region27: #{up_cbr_forward.1} parent=11 // pred_region
        _
      $region28: #{up_cbr_forward.1} parent=11 // pred_fallthru
        _
      // Predicated region
      $region29: #{up_cbr_forward.1} parent=11 // pred_check
        %p289 = pneg %p173
      $region30: #{up_cbr_forward.1} parent=11 // pred_check_branch
        %291 = sbr.rel (%p289) target = $region32
      $region31: #{up_cbr_forward.1} parent=11 // pred_region
        _
      $region32: #{up_cbr_forward.1} parent=11 // pred_fallthru
        _
      // Predicated region
      $region33: #{up_cbr_forward.1} parent=11 // pred_check
        %p292 = pneg %p194
      $region34: #{up_cbr_forward.1} parent=11 // pred_check_branch
        %294 = sbr.rel (%p292) target = $region36
      $region35: #{up_cbr_forward.1} parent=11 // pred_region
        _
      $region36: #{up_cbr_forward.1} parent=11 // pred_fallthru
        _
      // Predicated region
      $region37: #{up_cbr_forward.1} parent=11 // pred_check
        %p295 = pneg %p215
      $region38: #{up_cbr_forward.1} parent=11 // pred_check_branch
        %297 = sbr.rel (%p295) target = $region40
      $region39: #{up_cbr_forward.1} parent=11 // pred_region
        _
      $region40: #{up_cbr_forward.1} parent=11 // pred_fallthru
        _
      // Predicated region
      $region41: #{up_cbr_forward.1} parent=11 // pred_check
        %p298 = pneg %p236
      $region42: #{up_cbr_forward.1} parent=11 // pred_check_branch
        %300 = sbr.rel (%p298) target = $region44
      $region43: #{up_cbr_forward.1} parent=11 // pred_region
        _
      $region44: #{up_cbr_forward.1} parent=11 // pred_fallthru
        _
    $region12: #{up_cbr_forward.1} parent=5 // pred_fallthru
      _
    %p301 = scmp.lt.s32.totalorder %s16, 2
    // Predicated region
    $region45: #{up_cbr_forward.1} parent=5 // pred_check
      %p302 = pneg %p301
    $region46: #{up_cbr_forward.1} parent=5 // pred_check_branch
      %304 = sbr.rel (%p302) target = $region48
    $region47: #{up_cbr_forward.1} parent=5 // pred_region
      // Predicated region
      $region49: #{up_cbr_forward.1} parent=47 // pred_check
        %p305 = pneg %p36
      $region50: #{up_cbr_forward.1} parent=47 // pred_check_branch
        %307 = sbr.rel (%p305) target = $region52
      $region51: #{up_cbr_forward.1} parent=47 // pred_region
        %p308 = scmp.lt.s32.totalorder %s16, 1
        %s309 = scalar_select %p308, %s16, 1
        %s310 = smul.addr %s309, 8
        %s311 = smul.addr %s310, 8
        %s312 = scalar_lea.vmem %s0, %s311
      $region52: #{up_cbr_forward.1} parent=47 // pred_fallthru
        _
      // Predicated region
      $region53: #{up_cbr_forward.1} parent=47 // pred_check
        %p313 = pneg %p62
      $region54: #{up_cbr_forward.1} parent=47 // pred_check_branch
        %315 = sbr.rel (%p313) target = $region56
      $region55: #{up_cbr_forward.1} parent=47 // pred_region
        %p316 = scmp.lt.s32.totalorder %s16, 1
        %s317 = scalar_select %p316, %s16, 1
        %s318 = smul.addr %s317, 2
        %s319 = smul.addr %s318, 8
        %s320 = scalar_lea.vmem %s1, %s319
      $region56: #{up_cbr_forward.1} parent=47 // pred_fallthru
        _
    $region48: #{up_cbr_forward.1} parent=5 // pred_fallthru
      _
    %p321 = scmp.le.s32.totalorder 1, %s16
    %p322 = scmp.lt.s32.totalorder %s16, 3
    %p323 = pnand %p321, %p322
    %p324 = pneg %p323
    // Predicated region
    $region57: #{up_cbr_forward.1} parent=5 // pred_check
      _
    $region58: #{up_cbr_forward.1} parent=5 // pred_check_branch
      %326 = sbr.rel (%p323) target = $region60
    $region59: #{up_cbr_forward.1} parent=5 // pred_region
      %s327 = ssub.s32 %s16, 1
      %p328 = scmp.lt.s32.totalorder %s21, 1
      %s329 = scalar_select %p328, %s21, 1
      %s330 = smul.addr %s329, 8
      %s331 = smul.addr %s330, 8
      %s332 = scalar_lea.vmem %s0, %s331
      %p333 = pneg %p42
      %p334 = pneg %p39
      %p335 = scmp.lt.s32.totalorder %s21, 1
      %s336 = scalar_select %p335, %s21, 1
      %s337 = smul.addr %s336, 2
      %s338 = smul.addr %s337, 8
      %s339 = scalar_lea.vmem %s1, %s338
      %p340 = pneg %p68
      %p341 = pneg %p65
      %p342 = pneg %p89
      %p343 = pneg %p86
      %p344 = pneg %p110
      %p345 = pneg %p107
      %p346 = pneg %p131
      %p347 = pneg %p128
      %p348 = pneg %p152
      %p349 = pneg %p149
      %p350 = pneg %p173
      %p351 = pneg %p170
      %p352 = pneg %p194
      %p353 = pneg %p191
      %p354 = pneg %p215
      %p355 = pneg %p212
      %p356 = pneg %p236
      %p357 = pneg %p233
      %p358 = pneg %p262
      %p359 = pneg %p259
      %p360 = scmp.lt.s32.totalorder %s21, 1
      %s361 = scalar_select %p360, %s21, 1
      %s362 = smul.addr %s361, 2
      %s363 = smul.addr %s362, 8
      %s364 = scalar_lea.vmem %s10, %s363
      %p365 = scmp.lt.s32.totalorder %s21, 1
      %s366 = scalar_select %p365, %s21, 1
      %s367 = smul.addr %s366, 8
      %s368 = smul.addr %s367, 8
      %s369 = scalar_lea.vmem %s0, %s368
      %p370 = scmp.lt.s32.totalorder %s21, 1
      %s371 = scalar_select %p370, %s21, 1
      %s372 = smul.addr %s371, 2
      %s373 = smul.addr %s372, 8
      %s374 = scalar_lea.vmem %s1, %s373
      %p375 = scmp.lt.s32.totalorder %s21, 1
      %s376 = scalar_select %p375, %s21, 1
      %s377 = smul.addr %s376, 2
      %s378 = smul.addr %s377, 8
      %s379 = scalar_lea.vmem %s10, %s378
      %vm380 = vcmask 138240
      %381 = vst.msk [vmem:[#allocation2] sm:$0xff] %vm380, 0.0
      %382 = vst.msk [vmem:[#allocation2 + $0x18] sm:$0xff] %vm380, 0.0
      %vm383 = vcmask 277640
      %384 = vst.msk [vmem:[#allocation2 + $0x10] sm:$0xff] %vm383, 0.0
      %385 = vst.msk [vmem:[#allocation2 + $0x28] sm:$0xff] %vm383, 0.0
      %v386 = vld [vmem:[%s374] sm:$0xff]
      %v387 = vld [vmem:[%s374 + $0x8] sm:$0xff]
      %390 = vrot.lane.b32.xlu0 %v386, 17
      %v391 = vpop.permute.xlu0 %390
      %392 = vrot.lane.b32.xlu0 %v387, 17
      %v393 = vpop.permute.xlu0 %392
      %v394 = vsel %vm380, %v391, %v393
      %vm398 = vcmask 1047688
      %399 = vst.msk [vmem:[#allocation2] sm:$0xff] %vm398, %v391
      %400 = vst [vmem:[#allocation2 + $0x8] sm:$0xff] %v394
      %401 = vst.msk [vmem:[#allocation2 + $0x10] sm:$0xff] %vm380, %v393
      %v402 = vld [vmem:[%s369] sm:$0xff]
      %v403 = vld [vmem:[%s369 + $0x8] sm:$0xff]
      %v404 = vld [vmem:[%s369 + $0x10] sm:$0xff]
      %v405 = vld [vmem:[%s369 + $0x18] sm:$0xff]
      %v406 = vld [vmem:[%s369 + $0x20] sm:$0xff]
      %v407 = vld [vmem:[%s369 + $0x28] sm:$0xff]
      %v408 = vld [vmem:[%s369 + $0x30] sm:$0xff]
      %v409 = vld [vmem:[%s369 + $0x38] sm:$0xff]
      %v410 = vld [vmem:[%s2] sm:$0xff]
      %v411 = vld [vmem:[%s2 + $0x8] sm:$0xff]
      %v412 = vld [vmem:[%s2 + $0x10] sm:$0xff]
      %v413 = vld [vmem:[%s2 + $0x18] sm:$0xff]
      %v414 = vld [vmem:[%s2 + $0x20] sm:$0xff]
      %v415 = vld [vmem:[%s2 + $0x28] sm:$0xff]
      %v416 = vld [vmem:[%s2 + $0x30] sm:$0xff]
      %v417 = vld [vmem:[%s2 + $0x38] sm:$0xff]
      %419 = vset.pattern.permute.xlu0 0
      %420 = vperm.xlu0 %419, %v410
      %v421 = vpop.permute.xlu0 %420
      %424 = vset.pattern.permute.xlu0 0
      %425 = vperm.xlu0 %424, %v411
      %v426 = vpop.permute.xlu0 %425
      %429 = vset.pattern.permute.xlu0 0
      %430 = vperm.xlu0 %429, %v412
      %v431 = vpop.permute.xlu0 %430
      %434 = vset.pattern.permute.xlu0 0
      %435 = vperm.xlu0 %434, %v413
      %v436 = vpop.permute.xlu0 %435
      %439 = vset.pattern.permute.xlu0 0
      %440 = vperm.xlu0 %439, %v414
      %v441 = vpop.permute.xlu0 %440
      %444 = vset.pattern.permute.xlu0 0
      %445 = vperm.xlu0 %444, %v415
      %v446 = vpop.permute.xlu0 %445
      %449 = vset.pattern.permute.xlu0 0
      %450 = vperm.xlu0 %449, %v416
      %v451 = vpop.permute.xlu0 %450
      %454 = vset.pattern.permute.xlu0 0
      %455 = vperm.xlu0 %454, %v417
      %v456 = vpop.permute.xlu0 %455
      %v458 = vmul.f32 %v402, %v421
      %v459 = vmul.f32 %v403, %v426
      %v460 = vmul.f32 %v404, %v431
      %v461 = vmul.f32 %v405, %v436
      %v462 = vmul.f32 %v406, %v441
      %v463 = vmul.f32 %v407, %v446
      %v464 = vmul.f32 %v408, %v451
      %v465 = vmul.f32 %v409, %v456
      %s466 = scalar_lea.vmem %s2, 64
      %v467 = vld [vmem:[%s466] sm:$0xff]
      %v468 = vld [vmem:[%s466 + $0x8] sm:$0xff]
      %v469 = vld [vmem:[%s466 + $0x10] sm:$0xff]
      %v470 = vld [vmem:[%s466 + $0x18] sm:$0xff]
      %v471 = vld [vmem:[%s466 + $0x20] sm:$0xff]
      %v472 = vld [vmem:[%s466 + $0x28] sm:$0xff]
      %v473 = vld [vmem:[%s466 + $0x30] sm:$0xff]
      %v474 = vld [vmem:[%s466 + $0x38] sm:$0xff]
      %476 = vset.pattern.permute.xlu0 0
      %477 = vperm.xlu0 %476, %v467
      %v478 = vpop.permute.xlu0 %477
      %481 = vset.pattern.permute.xlu0 0
      %482 = vperm.xlu0 %481, %v468
      %v483 = vpop.permute.xlu0 %482
      %486 = vset.pattern.permute.xlu0 0
      %487 = vperm.xlu0 %486, %v469
      %v488 = vpop.permute.xlu0 %487
      %491 = vset.pattern.permute.xlu0 0
      %492 = vperm.xlu0 %491, %v470
      %v493 = vpop.permute.xlu0 %492
      %496 = vset.pattern.permute.xlu0 0
      %497 = vperm.xlu0 %496, %v471
      %v498 = vpop.permute.xlu0 %497
      %501 = vset.pattern.permute.xlu0 0
      %502 = vperm.xlu0 %501, %v472
      %v503 = vpop.permute.xlu0 %502
      %506 = vset.pattern.permute.xlu0 0
      %507 = vperm.xlu0 %506, %v473
      %v508 = vpop.permute.xlu0 %507
      %511 = vset.pattern.permute.xlu0 0
      %512 = vperm.xlu0 %511, %v474
      %v513 = vpop.permute.xlu0 %512
      %v515 = vmul.f32 %v402, %v478
      %v516 = vmul.f32 %v403, %v483
      %v517 = vmul.f32 %v404, %v488
      %v518 = vmul.f32 %v405, %v493
      %v519 = vmul.f32 %v406, %v498
      %v520 = vmul.f32 %v407, %v503
      %v521 = vmul.f32 %v408, %v508
      %v522 = vmul.f32 %v409, %v513
      %s523 = scalar_lea.vmem %s2, 128
      %v524 = vld [vmem:[%s523] sm:$0xff]
      %v525 = vld [vmem:[%s523 + $0x8] sm:$0xff]
      %v526 = vld [vmem:[%s523 + $0x10] sm:$0xff]
      %v527 = vld [vmem:[%s523 + $0x18] sm:$0xff]
      %v528 = vld [vmem:[%s523 + $0x20] sm:$0xff]
      %v529 = vld [vmem:[%s523 + $0x28] sm:$0xff]
      %v530 = vld [vmem:[%s523 + $0x30] sm:$0xff]
      %v531 = vld [vmem:[%s523 + $0x38] sm:$0xff]
      %533 = vset.pattern.permute.xlu0 0
      %534 = vperm.xlu0 %533, %v524
      %v535 = vpop.permute.xlu0 %534
      %538 = vset.pattern.permute.xlu0 0
      %539 = vperm.xlu0 %538, %v525
      %v540 = vpop.permute.xlu0 %539
      %543 = vset.pattern.permute.xlu0 0
      %544 = vperm.xlu0 %543, %v526
      %v545 = vpop.permute.xlu0 %544
      %548 = vset.pattern.permute.xlu0 0
      %549 = vperm.xlu0 %548, %v527
      %v550 = vpop.permute.xlu0 %549
      %553 = vset.pattern.permute.xlu0 0
      %554 = vperm.xlu0 %553, %v528
      %v555 = vpop.permute.xlu0 %554
      %558 = vset.pattern.permute.xlu0 0
      %559 = vperm.xlu0 %558, %v529
      %v560 = vpop.permute.xlu0 %559
      %563 = vset.pattern.permute.xlu0 0
      %564 = vperm.xlu0 %563, %v530
      %v565 = vpop.permute.xlu0 %564
      %568 = vset.pattern.permute.xlu0 0
      %569 = vperm.xlu0 %568, %v531
      %v570 = vpop.permute.xlu0 %569
      %v572 = vmul.f32 %v402, %v535
      %v573 = vmul.f32 %v403, %v540
      %v574 = vmul.f32 %v404, %v545
      %v575 = vmul.f32 %v405, %v550
      %v576 = vmul.f32 %v406, %v555
      %v577 = vmul.f32 %v407, %v560
      %v578 = vmul.f32 %v408, %v565
      %v579 = vmul.f32 %v409, %v570
      %s580 = scalar_lea.vmem %s2, 192
      %v581 = vld [vmem:[%s580] sm:$0xff]
      %v582 = vld [vmem:[%s580 + $0x8] sm:$0xff]
      %v583 = vld [vmem:[%s580 + $0x10] sm:$0xff]
      %v584 = vld [vmem:[%s580 + $0x18] sm:$0xff]
      %v585 = vld [vmem:[%s580 + $0x20] sm:$0xff]
      %v586 = vld [vmem:[%s580 + $0x28] sm:$0xff]
      %v587 = vld [vmem:[%s580 + $0x30] sm:$0xff]
      %v588 = vld [vmem:[%s580 + $0x38] sm:$0xff]
      %590 = vset.pattern.permute.xlu0 0
      %591 = vperm.xlu0 %590, %v581
      %v592 = vpop.permute.xlu0 %591
      %595 = vset.pattern.permute.xlu0 0
      %596 = vperm.xlu0 %595, %v582
      %v597 = vpop.permute.xlu0 %596
      %600 = vset.pattern.permute.xlu0 0
      %601 = vperm.xlu0 %600, %v583
      %v602 = vpop.permute.xlu0 %601
      %605 = vset.pattern.permute.xlu0 0
      %606 = vperm.xlu0 %605, %v584
      %v607 = vpop.permute.xlu0 %606
      %610 = vset.pattern.permute.xlu0 0
      %611 = vperm.xlu0 %610, %v585
      %v612 = vpop.permute.xlu0 %611
      %615 = vset.pattern.permute.xlu0 0
      %616 = vperm.xlu0 %615, %v586
      %v617 = vpop.permute.xlu0 %616
      %620 = vset.pattern.permute.xlu0 0
      %621 = vperm.xlu0 %620, %v587
      %v622 = vpop.permute.xlu0 %621
      %625 = vset.pattern.permute.xlu0 0
      %626 = vperm.xlu0 %625, %v588
      %v627 = vpop.permute.xlu0 %626
      %v629 = vmul.f32 %v402, %v592
      %v630 = vmul.f32 %v403, %v597
      %v631 = vmul.f32 %v404, %v602
      %v632 = vmul.f32 %v405, %v607
      %v633 = vmul.f32 %v406, %v612
      %v634 = vmul.f32 %v407, %v617
      %v635 = vmul.f32 %v408, %v622
      %v636 = vmul.f32 %v409, %v627
      %645 = vrot.lane.b32.xlu0 %v515, 8
      %v646 = vpop.permute.xlu0 %645
      %647 = vrot.lane.b32.xlu0 %v516, 8
      %v648 = vpop.permute.xlu0 %647
      %649 = vrot.lane.b32.xlu0 %v517, 8
      %v650 = vpop.permute.xlu0 %649
      %651 = vrot.lane.b32.xlu0 %v518, 8
      %v652 = vpop.permute.xlu0 %651
      %653 = vrot.lane.b32.xlu0 %v519, 8
      %v654 = vpop.permute.xlu0 %653
      %655 = vrot.lane.b32.xlu0 %v520, 8
      %v656 = vpop.permute.xlu0 %655
      %657 = vrot.lane.b32.xlu0 %v521, 8
      %v658 = vpop.permute.xlu0 %657
      %659 = vrot.lane.b32.xlu0 %v522, 8
      %v660 = vpop.permute.xlu0 %659
      %677 = vrot.lane.b32.xlu0 %v572, 16
      %v678 = vpop.permute.xlu0 %677
      %679 = vrot.lane.b32.xlu0 %v573, 16
      %v680 = vpop.permute.xlu0 %679
      %681 = vrot.lane.b32.xlu0 %v574, 16
      %v682 = vpop.permute.xlu0 %681
      %683 = vrot.lane.b32.xlu0 %v575, 16
      %v684 = vpop.permute.xlu0 %683
      %685 = vrot.lane.b32.xlu0 %v576, 16
      %v686 = vpop.permute.xlu0 %685
      %687 = vrot.lane.b32.xlu0 %v577, 16
      %v688 = vpop.permute.xlu0 %687
      %689 = vrot.lane.b32.xlu0 %v578, 16
      %v690 = vpop.permute.xlu0 %689
      %691 = vrot.lane.b32.xlu0 %v579, 16
      %v692 = vpop.permute.xlu0 %691
      %709 = vrot.lane.b32.xlu0 %v629, 24
      %v710 = vpop.permute.xlu0 %709
      %711 = vrot.lane.b32.xlu0 %v630, 24
      %v712 = vpop.permute.xlu0 %711
      %713 = vrot.lane.b32.xlu0 %v631, 24
      %v714 = vpop.permute.xlu0 %713
      %715 = vrot.lane.b32.xlu0 %v632, 24
      %v716 = vpop.permute.xlu0 %715
      %717 = vrot.lane.b32.xlu0 %v633, 24
      %v718 = vpop.permute.xlu0 %717
      %719 = vrot.lane.b32.xlu0 %v634, 24
      %v720 = vpop.permute.xlu0 %719
      %721 = vrot.lane.b32.xlu0 %v635, 24
      %v722 = vpop.permute.xlu0 %721
      %723 = vrot.lane.b32.xlu0 %v636, 24
      %v724 = vpop.permute.xlu0 %723
      %vm733 = vcmask 64512
      %v734 = vsel %vm733, %v458, %v646
      %v735 = vsel %vm733, %v459, %v648
      %v736 = vsel %vm733, %v460, %v650
      %v737 = vsel %vm733, %v461, %v652
      %v738 = vsel %vm733, %v462, %v654
      %v739 = vsel %vm733, %v463, %v656
      %v740 = vsel %vm733, %v464, %v658
      %v741 = vsel %vm733, %v465, %v660
      %vm742 = vcmask 130048
      %v743 = vsel %vm742, %v734, %v678
      %v744 = vsel %vm742, %v735, %v680
      %v745 = vsel %vm742, %v736, %v682
      %v746 = vsel %vm742, %v737, %v684
      %v747 = vsel %vm742, %v738, %v686
      %v748 = vsel %vm742, %v739, %v688
      %v749 = vsel %vm742, %v740, %v690
      %v750 = vsel %vm742, %v741, %v692
      %vm751 = vcmask 195584
      %v752 = vsel %vm751, %v743, %v710
      %v753 = vsel %vm751, %v744, %v712
      %v754 = vsel %vm751, %v745, %v714
      %v755 = vsel %vm751, %v746, %v716
      %v756 = vsel %vm751, %v747, %v718
      %v757 = vsel %vm751, %v748, %v720
      %v758 = vsel %vm751, %v749, %v722
      %v759 = vsel %vm751, %v750, %v724
      %v760 = vld [vmem:[%s3] sm:$0xff]
      %v761 = vld [vmem:[%s3 + $0x8] sm:$0xff]
      %v762 = vld [vmem:[%s3 + $0x10] sm:$0xff]
      %v763 = vld [vmem:[%s3 + $0x18] sm:$0xff]
      %vm764 = vcmask 261120
      %v766 = vsel %vm764, %v752, 0
      %v769 = vsel %vm764, %v753, 0
      %v772 = vsel %vm764, %v754, 0
      %v775 = vsel %vm764, %v755, 0
      %v778 = vsel %vm764, %v756, 0
      %v781 = vsel %vm764, %v757, 0
      %v784 = vsel %vm764, %v758, 0
      %v787 = vsel %vm764, %v759, 0
      %789 = vmatprep.subr.mxu0 0.0
      %790 = vmatpush1.msra.mxu0 %v760
      %791 = vmatprep.subr.mxu0 0.0
      %792 = vmatpush1.msra.mxu0 %v761
      %793 = vmatprep.subr.mxu0 0.0
      %794 = vmatpush1.msra.mxu0 %v762
      %795 = vmatprep.subr.mxu0 0.0
      %796 = vmatpush1.msra.mxu0 %v763
      %797 = vmatprep.subr.mxu0 0.0
      %798 = vmatpush1.msra.mxu0 0.0
      %799 = vmatprep.subr.mxu0 0.0
      %800 = vmatpush1.msra.mxu0 0.0
      %801 = vmatprep.subr.mxu0 0.0
      %802 = vmatpush1.msra.mxu0 0.0
      %803 = vmatprep.subr.mxu0 0.0
      %804 = vmatpush1.msra.mxu0 0.0
      %805 = vmatprep.subr.mxu0 0.0
      %806 = vmatpush1.msra.mxu0 0.0
      %807 = vmatprep.subr.mxu0 0.0
      %808 = vmatpush1.msra.mxu0 0.0
      %809 = vmatprep.subr.mxu0 0.0
      %810 = vmatpush1.msra.mxu0 0.0
      %811 = vmatprep.subr.mxu0 0.0
      %812 = vmatpush1.msra.mxu0 0.0
      %813 = vmatprep.subr.mxu0 0.0
      %814 = vmatpush1.msra.mxu0 0.0
      %815 = vmatprep.subr.mxu0 0.0
      %816 = vmatpush1.msra.mxu0 0.0
      %817 = vmatprep.subr.mxu0 0.0
      %818 = vmatpush1.msra.mxu0 0.0
      %819 = vmatprep.subr.mxu0 0.0
      %820 = vmatpush1.msra.mxu0 0.0
      %821 = vmatprep.subr.mxu0 0.0
      %822 = vmatpush1.msra.mxu0 0.0
      %823 = vmatprep.subr.mxu0 0.0
      %824 = vmatpush1.msra.mxu0 0.0
      %825 = vmatprep.subr.mxu0 0.0
      %826 = vmatpush1.msra.mxu0 0.0
      %827 = vmatprep.subr.mxu0 0.0
      %828 = vmatpush1.msra.mxu0 0.0
      %829 = vmatprep.subr.mxu0 0.0
      %830 = vmatpush1.msra.mxu0 0.0
      %831 = vmatprep.subr.mxu0 0.0
      %832 = vmatpush1.msra.mxu0 0.0
      %833 = vmatprep.subr.mxu0 0.0
      %834 = vmatpush1.msra.mxu0 0.0
      %835 = vmatprep.subr.mxu0 0.0
      %836 = vmatpush1.msra.mxu0 0.0
      %837 = vmatprep.subr.mxu0 0.0
      %838 = vmatpush1.msra.mxu0 0.0
      %839 = vmatprep.subr.mxu0 0.0
      %840 = vmatpush1.msra.mxu0 0.0
      %841 = vmatprep.subr.mxu0 0.0
      %842 = vmatpush1.msra.mxu0 0.0
      %843 = vmatprep.subr.mxu0 0.0
      %844 = vmatpush1.msra.mxu0 0.0
      %845 = vmatprep.subr.mxu0 0.0
      %846 = vmatpush1.msra.mxu0 0.0
      %847 = vmatprep.subr.mxu0 0.0
      %848 = vmatpush1.msra.mxu0 0.0
      %849 = vmatprep.subr.mxu0 0.0
      %850 = vmatpush1.msra.mxu0 0.0
      %851 = vmatprep.subr.mxu0 0.0
      %852 = vmatpush1.msra.mxu0 0.0
      %853 = vmatprep.mubr.f32.mxu0 0.0
      %854 = vmatmul.mubr.f32.gmra.mrb[0].mxu0 %v766
      %v855 = vpop.f32.mrb[0].mxu0
      %v856 = vadd.f32 0.0, %v855
      %v857 = vpop.f32.mrb[0].mxu0
      %858 = vmatprep.mubr.f32.mxu0 0.0
      %859 = vmatmul.mubr.f32.gmra.mrb[0].mxu0 %v769
      %v860 = vpop.f32.mrb[0].mxu0
      %v861 = vadd.f32 0.0, %v860
      %v862 = vpop.f32.mrb[0].mxu0
      %863 = vmatprep.mubr.f32.mxu0 0.0
      %864 = vmatmul.mubr.f32.gmra.mrb[0].mxu0 %v772
      %v865 = vpop.f32.mrb[0].mxu0
      %v866 = vadd.f32 0.0, %v865
      %v867 = vpop.f32.mrb[0].mxu0
      %868 = vmatprep.mubr.f32.mxu0 0.0
      %869 = vmatmul.mubr.f32.gmra.mrb[0].mxu0 %v775
      %v870 = vpop.f32.mrb[0].mxu0
      %v871 = vadd.f32 0.0, %v870
      %v872 = vpop.f32.mrb[0].mxu0
      %873 = vmatprep.mubr.f32.mxu0 0.0
      %874 = vmatmul.mubr.f32.gmra.mrb[0].mxu0 %v778
      %v875 = vpop.f32.mrb[0].mxu0
      %v876 = vadd.f32 0.0, %v875
      %v877 = vpop.f32.mrb[0].mxu0
      %878 = vmatprep.mubr.f32.mxu0 0.0
      %879 = vmatmul.mubr.f32.gmra.mrb[0].mxu0 %v781
      %v880 = vpop.f32.mrb[0].mxu0
      %v881 = vadd.f32 0.0, %v880
      %v882 = vpop.f32.mrb[0].mxu0
      %883 = vmatprep.mubr.f32.mxu0 0.0
      %884 = vmatmul.mubr.f32.gmra.mrb[0].mxu0 %v784
      %v885 = vpop.f32.mrb[0].mxu0
      %v886 = vadd.f32 0.0, %v885
      %v887 = vpop.f32.mrb[0].mxu0
      %888 = vmatprep.mubr.f32.mxu0 0.0
      %889 = vmatmul.mubr.f32.gmra.mrb[0].mxu0 %v787
      %v890 = vpop.f32.mrb[0].mxu0
      %v891 = vadd.f32 0.0, %v890
      %v892 = vpop.f32.mrb[0].mxu0
      %893 = vdwg.mxu0
      %v894 = vld [vmem:[%s4] sm:$0xff]
      %v896 = vcombine.high %v894, %v894
      %v898 = vunpack.c.l.s4 1966171168
      %v899 = vunpack.c.0.s8 %v898
      %v900 = vlaneseq
      %v901 = vshrl.u32 %v900, 7
      %v902 = vsub.s32 %v899, %v901
      %v903 = vrot.slane %v894, %v902
      %v905 = vunpack.c.l.s4 1966171168
      %v906 = vunpack.c.0.s8 %v905
      %v907 = vlaneseq
      %v908 = vshrl.u32 %v907, 7
      %v909 = vsub.s32 %v906, %v908
      %v910 = vrot.slane %v896, %v909
      %v911 = vcombine.high %v903, %v903
      %v912 = vcombine.high %v910, %v910
      %v914 = vunpack.c.l.s4 1966171168
      %v915 = vunpack.c.0.s8 %v914
      %v916 = vlaneseq
      %v917 = vshrl.u32 %v916, 7
      %v918 = vsub.s32 %v915, %v917
      %v919 = vrot.slane %v903, %v918
      %v921 = vunpack.c.l.s4 1966171168
      %v922 = vunpack.c.0.s8 %v921
      %v923 = vlaneseq
      %v924 = vshrl.u32 %v923, 7
      %v925 = vsub.s32 %v922, %v924
      %v926 = vrot.slane %v910, %v925
      %v928 = vunpack.c.l.s4 1966171168
      %v929 = vunpack.c.0.s8 %v928
      %v930 = vlaneseq
      %v931 = vshrl.u32 %v930, 7
      %v932 = vsub.s32 %v929, %v931
      %v933 = vrot.slane %v911, %v932
      %v935 = vunpack.c.l.s4 1966171168
      %v936 = vunpack.c.0.s8 %v935
      %v937 = vlaneseq
      %v938 = vshrl.u32 %v937, 7
      %v939 = vsub.s32 %v936, %v938
      %v940 = vrot.slane %v912, %v939
      %v941 = vcombine.high %v919, %v919
      %v942 = vcombine.high %v926, %v926
      %v943 = vcombine.high %v933, %v933
      %v944 = vcombine.high %v940, %v940
      %v945 = vlaneseq
      %v946 = vshrl.u32 %v945, 7
      %v947 = vsub.s32 0, %v946
      %v948 = vrot.slane %v919, %v947
      %v949 = vlaneseq
      %v950 = vshrl.u32 %v949, 7
      %v951 = vsub.s32 0, %v950
      %v952 = vrot.slane %v933, %v951
      %v953 = vlaneseq
      %v954 = vshrl.u32 %v953, 7
      %v955 = vsub.s32 0, %v954
      %v956 = vrot.slane %v941, %v955
      %v957 = vlaneseq
      %v958 = vshrl.u32 %v957, 7
      %v959 = vsub.s32 0, %v958
      %v960 = vrot.slane %v943, %v959
      %v961 = vlaneseq
      %v962 = vshrl.u32 %v961, 7
      %v963 = vsub.s32 0, %v962
      %v964 = vrot.slane %v926, %v963
      %v965 = vlaneseq
      %v966 = vshrl.u32 %v965, 7
      %v967 = vsub.s32 0, %v966
      %v968 = vrot.slane %v940, %v967
      %v969 = vlaneseq
      %v970 = vshrl.u32 %v969, 7
      %v971 = vsub.s32 0, %v970
      %v972 = vrot.slane %v942, %v971
      %v973 = vlaneseq
      %v974 = vshrl.u32 %v973, 7
      %v975 = vsub.s32 0, %v974
      %v976 = vrot.slane %v944, %v975
      %v985 = vadd.f32 %v856, %v948
      %v986 = vadd.f32 %v861, %v952
      %v987 = vadd.f32 %v866, %v956
      %v988 = vadd.f32 %v871, %v960
      %v989 = vadd.f32 %v876, %v964
      %v990 = vadd.f32 %v881, %v968
      %v991 = vadd.f32 %v886, %v972
      %v992 = vadd.f32 %v891, %v976
      %v1001 = vrot.slane %v986, 7
      %vm1002 = vcmask 1041409
      %v1003 = vsel %vm1002, %v1001, %v985
      %v1004 = vrot.slane %v987, 6
      %vm1005 = vcmask 1042434
      %v1006 = vsel %vm1005, %v1004, %v1003
      %v1007 = vrot.slane %v988, 5
      %vm1008 = vcmask 1043459
      %v1009 = vsel %vm1008, %v1007, %v1006
      %v1010 = vrot.slane %v989, 4
      %vm1011 = vcmask 1044484
      %v1012 = vsel %vm1011, %v1010, %v1009
      %v1013 = vrot.slane %v990, 3
      %vm1014 = vcmask 1045509
      %v1015 = vsel %vm1014, %v1013, %v1012
      %v1016 = vrot.slane %v991, 2
      %vm1017 = vcmask 1046534
      %v1018 = vsel %vm1017, %v1016, %v1015
      %v1019 = vrot.slane %v992, 1
      %vm1020 = vcmask 1047559
      %v1021 = vsel %vm1020, %v1019, %v1018
      %1022 = vrot.lane.b32.xlu0 %v1021, 17
      %v1023 = vpop.permute.xlu0 %1022
      %vm1025 = vcmask 400520
      %1026 = vst.msk [vmem:[#allocation2 + $0x18] sm:$0xff] %vm1025, %v1023
      %v1027 = vrot.slane %v985, 1
      %v1028 = vsel %vm1002, %v986, %v1027
      %v1029 = vrot.slane %v987, 7
      %v1030 = vsel %vm1005, %v1029, %v1028
      %v1031 = vrot.slane %v988, 6
      %v1032 = vsel %vm1008, %v1031, %v1030
      %v1033 = vrot.slane %v989, 5
      %v1034 = vsel %vm1011, %v1033, %v1032
      %v1035 = vrot.slane %v990, 4
      %v1036 = vsel %vm1014, %v1035, %v1034
      %v1037 = vrot.slane %v991, 3
      %v1038 = vsel %vm1017, %v1037, %v1036
      %v1039 = vrot.slane %v992, 2
      %v1040 = vsel %vm1020, %v1039, %v1038
      %1041 = vrot.lane.b32.xlu0 %v1040, 49
      %v1042 = vpop.permute.xlu0 %1041
      %vm1044 = vcmask 662920
      %1045 = vst.msk [vmem:[#allocation2 + $0x18] sm:$0xff] %vm1044, %v1042
      %v1046 = vrot.slane %v985, 2
      %v1047 = vrot.slane %v986, 1
      %v1048 = vsel %vm1002, %v1047, %v1046
      %v1049 = vsel %vm1005, %v987, %v1048
      %v1050 = vrot.slane %v988, 7
      %v1051 = vsel %vm1008, %v1050, %v1049
      %v1052 = vrot.slane %v989, 6
      %v1053 = vsel %vm1011, %v1052, %v1051
      %v1054 = vrot.slane %v990, 5
      %v1055 = vsel %vm1014, %v1054, %v1053
      %v1056 = vrot.slane %v991, 4
      %v1057 = vsel %vm1017, %v1056, %v1055
      %v1058 = vrot.slane %v992, 3
      %v1059 = vsel %vm1020, %v1058, %v1057
      %1060 = vrot.lane.b32.xlu0 %v1059, 81
      %v1061 = vpop.permute.xlu0 %1060
      %vm1063 = vcmask 925320
      %1064 = vst.msk [vmem:[#allocation2 + $0x18] sm:$0xff] %vm1063, %v1061
      %v1065 = vrot.slane %v985, 3
      %v1066 = vrot.slane %v986, 2
      %v1067 = vsel %vm1002, %v1066, %v1065
      %v1068 = vrot.slane %v987, 1
      %v1069 = vsel %vm1005, %v1068, %v1067
      %v1070 = vsel %vm1008, %v988, %v1069
      %v1071 = vrot.slane %v989, 7
      %v1072 = vsel %vm1011, %v1071, %v1070
      %v1073 = vrot.slane %v990, 6
      %v1074 = vsel %vm1014, %v1073, %v1072
      %v1075 = vrot.slane %v991, 5
      %v1076 = vsel %vm1017, %v1075, %v1074
      %v1077 = vrot.slane %v992, 4
      %v1078 = vsel %vm1020, %v1077, %v1076
      %1079 = vrot.lane.b32.xlu0 %v1078, 113
      %v1080 = vpop.permute.xlu0 %1079
      %vm1082 = vcmask 1048456
      %1083 = vst.msk [vmem:[#allocation2 + $0x18] sm:$0xff] %vm1082, %v1080
      %1084 = vst.msk [vmem:[#allocation2 + $0x20] sm:$0xff] %vm380, %v1080
      %v1085 = vrot.slane %v985, 4
      %v1086 = vrot.slane %v986, 3
      %v1087 = vsel %vm1002, %v1086, %v1085
      %v1088 = vrot.slane %v987, 2
      %v1089 = vsel %vm1005, %v1088, %v1087
      %v1090 = vrot.slane %v988, 1
      %v1091 = vsel %vm1008, %v1090, %v1089
      %v1092 = vsel %vm1011, %v989, %v1091
      %v1093 = vrot.slane %v990, 7
      %v1094 = vsel %vm1014, %v1093, %v1092
      %v1095 = vrot.slane %v991, 6
      %v1096 = vsel %vm1017, %v1095, %v1094
      %v1097 = vrot.slane %v992, 5
      %v1098 = vsel %vm1020, %v1097, %v1096
      %1099 = vrot.lane.b32.xlu0 %v1098, 17
      %v1100 = vpop.permute.xlu0 %1099
      %1102 = vst.msk [vmem:[#allocation2 + $0x20] sm:$0xff] %vm1025, %v1100
      %v1103 = vrot.slane %v985, 5
      %v1104 = vrot.slane %v986, 4
      %v1105 = vsel %vm1002, %v1104, %v1103
      %v1106 = vrot.slane %v987, 3
      %v1107 = vsel %vm1005, %v1106, %v1105
      %v1108 = vrot.slane %v988, 2
      %v1109 = vsel %vm1008, %v1108, %v1107
      %v1110 = vrot.slane %v989, 1
      %v1111 = vsel %vm1011, %v1110, %v1109
      %v1112 = vsel %vm1014, %v990, %v1111
      %v1113 = vrot.slane %v991, 7
      %v1114 = vsel %vm1017, %v1113, %v1112
      %v1115 = vrot.slane %v992, 6
      %v1116 = vsel %vm1020, %v1115, %v1114
      %1117 = vrot.lane.b32.xlu0 %v1116, 49
      %v1118 = vpop.permute.xlu0 %1117
      %1120 = vst.msk [vmem:[#allocation2 + $0x20] sm:$0xff] %vm1044, %v1118
      %v1121 = vrot.slane %v985, 6
      %v1122 = vrot.slane %v986, 5
      %v1123 = vsel %vm1002, %v1122, %v1121
      %v1124 = vrot.slane %v987, 4
      %v1125 = vsel %vm1005, %v1124, %v1123
      %v1126 = vrot.slane %v988, 3
      %v1127 = vsel %vm1008, %v1126, %v1125
      %v1128 = vrot.slane %v989, 2
      %v1129 = vsel %vm1011, %v1128, %v1127
      %v1130 = vrot.slane %v990, 1
      %v1131 = vsel %vm1014, %v1130, %v1129
      %v1132 = vsel %vm1017, %v991, %v1131
      %v1133 = vrot.slane %v992, 7
      %v1134 = vsel %vm1020, %v1133, %v1132
      %1135 = vrot.lane.b32.xlu0 %v1134, 81
      %v1136 = vpop.permute.xlu0 %1135
      %1138 = vst.msk [vmem:[#allocation2 + $0x20] sm:$0xff] %vm1063, %v1136
      %v1139 = vrot.slane %v985, 7
      %v1140 = vrot.slane %v986, 6
      %v1141 = vsel %vm1002, %v1140, %v1139
      %v1142 = vrot.slane %v987, 5
      %v1143 = vsel %vm1005, %v1142, %v1141
      %v1144 = vrot.slane %v988, 4
      %v1145 = vsel %vm1008, %v1144, %v1143
      %v1146 = vrot.slane %v989, 3
      %v1147 = vsel %vm1011, %v1146, %v1145
      %v1148 = vrot.slane %v990, 2
      %v1149 = vsel %vm1014, %v1148, %v1147
      %v1150 = vrot.slane %v991, 1
      %v1151 = vsel %vm1017, %v1150, %v1149
      %v1152 = vsel %vm1020, %v992, %v1151
      %1153 = vrot.lane.b32.xlu0 %v1152, 113
      %v1154 = vpop.permute.xlu0 %1153
      %1156 = vst.msk [vmem:[#allocation2 + $0x20] sm:$0xff] %vm1082, %v1154
      %1157 = vst.msk [vmem:[#allocation2 + $0x28] sm:$0xff] %vm380, %v1154
      %v1158 = vld [vmem:[#allocation2] sm:$0xff]
      %v1159 = vld [vmem:[#allocation2 + $0x8] sm:$0xff]
      %v1160 = vld [vmem:[#allocation2 + $0x18] sm:$0xff]
      %v1161 = vld [vmem:[#allocation2 + $0x20] sm:$0xff]
      %v1162 = vld [vmem:[%s8] sm:$0x3]
      %v1164 = vlaneseq
      %v1165 = vshrl.u32 %v1164, 7
      %v1166 = vsub.s32 0, %v1165
      %v1167 = vrot.slane %v1162, %v1166
      %v1168 = vlaneseq
      %v1169 = vshrl.u32 %v1168, 7
      %v1170 = vsub.s32 1, %v1169
      %v1171 = vrot.slane %v1162, %v1170
      %v1174 = vmul.f32 %v1158, %v1167
      %v1175 = vmul.f32 %v1159, %v1171
      %v1176 = vmul.f32 %v1160, %v1167
      %v1177 = vmul.f32 %v1161, %v1171
      %v1178 = vld [vmem:[#allocation2 + $0x10] sm:$0xff]
      %v1179 = vld [vmem:[#allocation2 + $0x28] sm:$0xff]
      %v1180 = vld [vmem:[%s9] sm:$0x3]
      %v1182 = vlaneseq
      %v1183 = vshrl.u32 %v1182, 7
      %v1184 = vsub.s32 0, %v1183
      %v1185 = vrot.slane %v1180, %v1184
      %v1186 = vlaneseq
      %v1187 = vshrl.u32 %v1186, 7
      %v1188 = vsub.s32 1, %v1187
      %v1189 = vrot.slane %v1180, %v1188
      %1190 = vrot.lane.b32.xlu0 %v1185, 2
      %v1191 = vpop.permute.xlu0 %1190
      %1192 = vrot.lane.b32.xlu0 %v1189, 2
      %v1193 = vpop.permute.xlu0 %1192
      %vm1194 = vcmask 15360
      %v1195 = vsel %vm1194, %v1191, %v1193
      %v1199 = vmul.f32 %v1158, %v1191
      %v1200 = vmul.f32 %v1159, %v1195
      %v1201 = vmul.f32 %v1178, %v1193
      %v1202 = vmul.f32 %v1160, %v1191
      %v1203 = vmul.f32 %v1161, %v1195
      %v1204 = vmul.f32 %v1179, %v1193
      %1205 = vrot.lane.b32.xlu0 %v1167, 16
      %v1206 = vpop.permute.xlu0 %1205
      %1207 = vrot.lane.b32.xlu0 %v1171, 16
      %v1208 = vpop.permute.xlu0 %1207
      %v1209 = vsel %vm742, %v1206, %v1208
      %v1213 = vmul.f32 %v1158, %v1206
      %v1214 = vmul.f32 %v1159, %v1209
      %v1215 = vmul.f32 %v1178, %v1208
      %v1216 = vmul.f32 %v1160, %v1206
      %v1217 = vmul.f32 %v1161, %v1209
      %v1218 = vmul.f32 %v1179, %v1208
      %1219 = vrot.lane.b32.xlu0 %v1185, 18
      %v1220 = vpop.permute.xlu0 %1219
      %1221 = vrot.lane.b32.xlu0 %v1189, 18
      %v1222 = vpop.permute.xlu0 %1221
      %vm1223 = vcmask 146432
      %v1224 = vsel %vm1223, %v1220, %v1222
      %v1228 = vmul.f32 %v1158, %v1220
      %v1229 = vmul.f32 %v1159, %v1224
      %v1230 = vmul.f32 %v1178, %v1222
      %v1231 = vmul.f32 %v1160, %v1220
      %v1232 = vmul.f32 %v1161, %v1224
      %v1233 = vmul.f32 %v1179, %v1222
      %1234 = vrot.lane.b32.xlu0 %v1167, 32
      %v1235 = vpop.permute.xlu0 %1234
      %1236 = vrot.lane.b32.xlu0 %v1171, 32
      %v1237 = vpop.permute.xlu0 %1236
      %v1238 = vsel %vm764, %v1235, %v1237
      %v1242 = vmul.f32 %v1158, %v1235
      %v1243 = vmul.f32 %v1159, %v1238
      %v1244 = vmul.f32 %v1178, %v1237
      %v1245 = vmul.f32 %v1160, %v1235
      %v1246 = vmul.f32 %v1161, %v1238
      %v1247 = vmul.f32 %v1179, %v1237
      %1248 = vrot.lane.b32.xlu0 %v1185, 34
      %v1249 = vpop.permute.xlu0 %1248
      %1250 = vrot.lane.b32.xlu0 %v1189, 34
      %v1251 = vpop.permute.xlu0 %1250
      %vm1252 = vcmask 277504
      %v1253 = vsel %vm1252, %v1249, %v1251
      %v1257 = vmul.f32 %v1158, %v1249
      %v1258 = vmul.f32 %v1159, %v1253
      %v1259 = vmul.f32 %v1178, %v1251
      %v1260 = vmul.f32 %v1160, %v1249
      %v1261 = vmul.f32 %v1161, %v1253
      %v1262 = vmul.f32 %v1179, %v1251
      %1269 = vrot.lane.b32.xlu0 %v1158, 127
      %v1270 = vpop.permute.xlu0 %1269
      %1271 = vrot.lane.b32.xlu0 %v1159, 127
      %v1272 = vpop.permute.xlu0 %1271
      %1273 = vrot.lane.b32.xlu0 %v1178, 127
      %v1274 = vpop.permute.xlu0 %1273
      %1275 = vrot.lane.b32.xlu0 %v1160, 127
      %v1276 = vpop.permute.xlu0 %1275
      %1277 = vrot.lane.b32.xlu0 %v1161, 127
      %v1278 = vpop.permute.xlu0 %1277
      %1279 = vrot.lane.b32.xlu0 %v1179, 127
      %v1280 = vpop.permute.xlu0 %1279
      %vm1281 = vcmask 1039360
      %v1282 = vsel %vm1281, %v1270, %v1272
      %v1283 = vsel %vm1281, %v1272, %v1274
      %v1284 = vsel %vm1281, %v1276, %v1278
      %v1285 = vsel %vm1281, %v1278, %v1280
      %1296 = vrot.lane.b32.xlu0 %v1199, 126
      %v1297 = vpop.permute.xlu0 %1296
      %1298 = vrot.lane.b32.xlu0 %v1200, 126
      %v1299 = vpop.permute.xlu0 %1298
      %1300 = vrot.lane.b32.xlu0 %v1201, 126
      %v1301 = vpop.permute.xlu0 %1300
      %1302 = vrot.lane.b32.xlu0 %v1202, 126
      %v1303 = vpop.permute.xlu0 %1302
      %1304 = vrot.lane.b32.xlu0 %v1203, 126
      %v1305 = vpop.permute.xlu0 %1304
      %1306 = vrot.lane.b32.xlu0 %v1204, 126
      %v1307 = vpop.permute.xlu0 %1306
      %vm1308 = vcmask 1031168
      %v1309 = vsel %vm1308, %v1297, %v1299
      %v1310 = vsel %vm1308, %v1299, %v1301
      %v1311 = vsel %vm1308, %v1303, %v1305
      %v1312 = vsel %vm1308, %v1305, %v1307
      %1323 = vrot.lane.b32.xlu0 %v1213, 112
      %v1324 = vpop.permute.xlu0 %1323
      %1325 = vrot.lane.b32.xlu0 %v1214, 112
      %v1326 = vpop.permute.xlu0 %1325
      %1327 = vrot.lane.b32.xlu0 %v1215, 112
      %v1328 = vpop.permute.xlu0 %1327
      %1329 = vrot.lane.b32.xlu0 %v1216, 112
      %v1330 = vpop.permute.xlu0 %1329
      %1331 = vrot.lane.b32.xlu0 %v1217, 112
      %v1332 = vpop.permute.xlu0 %1331
      %1333 = vrot.lane.b32.xlu0 %v1218, 112
      %v1334 = vpop.permute.xlu0 %1333
      %vm1335 = vcmask 916480
      %v1336 = vsel %vm1335, %v1324, %v1326
      %v1337 = vsel %vm1335, %v1326, %v1328
      %v1338 = vsel %vm1335, %v1330, %v1332
      %v1339 = vsel %vm1335, %v1332, %v1334
      %1344 = vrot.lane.b32.xlu0 %v1158, 111
      %v1345 = vpop.permute.xlu0 %1344
      %1346 = vrot.lane.b32.xlu0 %v1159, 111
      %v1347 = vpop.permute.xlu0 %1346
      %1348 = vrot.lane.b32.xlu0 %v1178, 111
      %v1349 = vpop.permute.xlu0 %1348
      %1350 = vrot.lane.b32.xlu0 %v1160, 111
      %v1351 = vpop.permute.xlu0 %1350
      %1352 = vrot.lane.b32.xlu0 %v1161, 111
      %v1353 = vpop.permute.xlu0 %1352
      %1354 = vrot.lane.b32.xlu0 %v1179, 111
      %v1355 = vpop.permute.xlu0 %1354
      %vm1356 = vcmask 908288
      %v1357 = vsel %vm1356, %v1345, %v1347
      %v1358 = vsel %vm1356, %v1347, %v1349
      %v1359 = vsel %vm1356, %v1351, %v1353
      %v1360 = vsel %vm1356, %v1353, %v1355
      %1371 = vrot.lane.b32.xlu0 %v1228, 110
      %v1372 = vpop.permute.xlu0 %1371
      %1373 = vrot.lane.b32.xlu0 %v1229, 110
      %v1374 = vpop.permute.xlu0 %1373
      %1375 = vrot.lane.b32.xlu0 %v1230, 110
      %v1376 = vpop.permute.xlu0 %1375
      %1377 = vrot.lane.b32.xlu0 %v1231, 110
      %v1378 = vpop.permute.xlu0 %1377
      %1379 = vrot.lane.b32.xlu0 %v1232, 110
      %v1380 = vpop.permute.xlu0 %1379
      %1381 = vrot.lane.b32.xlu0 %v1233, 110
      %v1382 = vpop.permute.xlu0 %1381
      %vm1383 = vcmask 900096
      %v1384 = vsel %vm1383, %v1372, %v1374
      %v1385 = vsel %vm1383, %v1374, %v1376
      %v1386 = vsel %vm1383, %v1378, %v1380
      %v1387 = vsel %vm1383, %v1380, %v1382
      %1398 = vrot.lane.b32.xlu0 %v1242, 96
      %v1399 = vpop.permute.xlu0 %1398
      %1400 = vrot.lane.b32.xlu0 %v1243, 96
      %v1401 = vpop.permute.xlu0 %1400
      %1402 = vrot.lane.b32.xlu0 %v1244, 96
      %v1403 = vpop.permute.xlu0 %1402
      %1404 = vrot.lane.b32.xlu0 %v1245, 96
      %v1405 = vpop.permute.xlu0 %1404
      %1406 = vrot.lane.b32.xlu0 %v1246, 96
      %v1407 = vpop.permute.xlu0 %1406
      %1408 = vrot.lane.b32.xlu0 %v1247, 96
      %v1409 = vpop.permute.xlu0 %1408
      %vm1410 = vcmask 785408
      %v1411 = vsel %vm1410, %v1399, %v1401
      %v1412 = vsel %vm1410, %v1401, %v1403
      %v1413 = vsel %vm1410, %v1405, %v1407
      %v1414 = vsel %vm1410, %v1407, %v1409
      %1419 = vrot.lane.b32.xlu0 %v1158, 95
      %v1420 = vpop.permute.xlu0 %1419
      %1421 = vrot.lane.b32.xlu0 %v1159, 95
      %v1422 = vpop.permute.xlu0 %1421
      %1423 = vrot.lane.b32.xlu0 %v1178, 95
      %v1424 = vpop.permute.xlu0 %1423
      %1425 = vrot.lane.b32.xlu0 %v1160, 95
      %v1426 = vpop.permute.xlu0 %1425
      %1427 = vrot.lane.b32.xlu0 %v1161, 95
      %v1428 = vpop.permute.xlu0 %1427
      %1429 = vrot.lane.b32.xlu0 %v1179, 95
      %v1430 = vpop.permute.xlu0 %1429
      %vm1431 = vcmask 777216
      %v1432 = vsel %vm1431, %v1420, %v1422
      %v1433 = vsel %vm1431, %v1422, %v1424
      %v1434 = vsel %vm1431, %v1426, %v1428
      %v1435 = vsel %vm1431, %v1428, %v1430
      %1446 = vrot.lane.b32.xlu0 %v1257, 94
      %v1447 = vpop.permute.xlu0 %1446
      %1448 = vrot.lane.b32.xlu0 %v1258, 94
      %v1449 = vpop.permute.xlu0 %1448
      %1450 = vrot.lane.b32.xlu0 %v1259, 94
      %v1451 = vpop.permute.xlu0 %1450
      %1452 = vrot.lane.b32.xlu0 %v1260, 94
      %v1453 = vpop.permute.xlu0 %1452
      %1454 = vrot.lane.b32.xlu0 %v1261, 94
      %v1455 = vpop.permute.xlu0 %1454
      %1456 = vrot.lane.b32.xlu0 %v1262, 94
      %v1457 = vpop.permute.xlu0 %1456
      %vm1458 = vcmask 769024
      %v1459 = vsel %vm1458, %v1447, %v1449
      %v1460 = vsel %vm1458, %v1449, %v1451
      %v1461 = vsel %vm1458, %v1453, %v1455
      %v1462 = vsel %vm1458, %v1455, %v1457
      %v1467 = vld [vmem:[%s5] sm:$0xff]
      %v1468 = vld [vmem:[%s5 + $0x8] sm:$0xff]
      %v1470 = vsel %vm742, %v1468, 0
      %1472 = vmatprep.subr.mxu0 %v1175
      %1473 = vmatpush1.msra.mxu0 %v1174
      %1474 = vmatprep.subr.mxu0 %v1177
      %1475 = vmatpush1.msra.mxu0 %v1176
      %1476 = vmatprep.subr.mxu0 %v1283
      %1477 = vmatpush1.msra.mxu0 %v1282
      %1478 = vmatprep.subr.mxu0 %v1285
      %1479 = vmatpush1.msra.mxu0 %v1284
      %1480 = vmatprep.subr.mxu0 %v1310
      %1481 = vmatpush1.msra.mxu0 %v1309
      %1482 = vmatprep.subr.mxu0 %v1312
      %1483 = vmatpush1.msra.mxu0 %v1311
      %1484 = vmatprep.subr.mxu0 %v1337
      %1485 = vmatpush1.msra.mxu0 %v1336
      %1486 = vmatprep.subr.mxu0 %v1339
      %1487 = vmatpush1.msra.mxu0 %v1338
      %1488 = vmatprep.subr.mxu0 %v1358
      %1489 = vmatpush1.msra.mxu0 %v1357
      %1490 = vmatprep.subr.mxu0 %v1360
      %1491 = vmatpush1.msra.mxu0 %v1359
      %1492 = vmatprep.subr.mxu0 %v1385
      %1493 = vmatpush1.msra.mxu0 %v1384
      %1494 = vmatprep.subr.mxu0 %v1387
      %1495 = vmatpush1.msra.mxu0 %v1386
      %1496 = vmatprep.subr.mxu0 %v1412
      %1497 = vmatpush1.msra.mxu0 %v1411
      %1498 = vmatprep.subr.mxu0 %v1414
      %1499 = vmatpush1.msra.mxu0 %v1413
      %1500 = vmatprep.subr.mxu0 %v1433
      %1501 = vmatpush1.msra.mxu0 %v1432
      %1502 = vmatprep.subr.mxu0 %v1435
      %1503 = vmatpush1.msra.mxu0 %v1434
      %1504 = vmatprep.subr.mxu0 %v1460
      %1505 = vmatpush1.msra.mxu0 %v1459
      %1506 = vmatprep.subr.mxu0 %v1462
      %1507 = vmatpush1.msra.mxu0 %v1461
      %1508 = vmatprep.subr.mxu0 0.0
      %1509 = vmatpush1.msra.mxu0 0.0
      %1510 = vmatprep.subr.mxu0 0.0
      %1511 = vmatpush1.msra.mxu0 0.0
      %1512 = vmatprep.subr.mxu0 0.0
      %1513 = vmatpush1.msra.mxu0 0.0
      %1514 = vmatprep.subr.mxu0 0.0
      %1515 = vmatpush1.msra.mxu0 0.0
      %1516 = vmatprep.subr.mxu0 0.0
      %1517 = vmatpush1.msra.mxu0 0.0
      %1518 = vmatprep.subr.mxu0 0.0
      %1519 = vmatpush1.msra.mxu0 0.0
      %1520 = vmatprep.subr.mxu0 0.0
      %1521 = vmatpush1.msra.mxu0 0.0
      %1522 = vmatprep.subr.mxu0 0.0
      %1523 = vmatpush1.msra.mxu0 0.0
      %1524 = vmatprep.subr.mxu0 0.0
      %1525 = vmatpush1.msra.mxu0 0.0
      %1526 = vmatprep.subr.mxu0 0.0
      %1527 = vmatpush1.msra.mxu0 0.0
      %1528 = vmatprep.subr.mxu0 0.0
      %1529 = vmatpush1.msra.mxu0 0.0
      %1530 = vmatprep.subr.mxu0 0.0
      %1531 = vmatpush1.msra.mxu0 0.0
      %1532 = vmatprep.subr.mxu0 0.0
      %1533 = vmatpush1.msra.mxu0 0.0
      %1534 = vmatprep.subr.mxu0 0.0
      %1535 = vmatpush1.msra.mxu0 0.0
      %1536 = vmatprep.mubr.f32.mxu0 %v1470
      %1537 = vmatmul.mubr.f32.gmra.mrb[0].mxu0 %v1467
      %v1538 = vpop.f32.mrb[0].mxu0
      %v1539 = vadd.f32 0.0, %v1538
      %v1540 = vpop.f32.mrb[0].mxu0
      %v1541 = vadd.f32 0.0, %v1540
      %1542 = vdwg.mxu0
      %v1543 = vld [vmem:[%s6] sm:$0xff]
      %1545 = vset.pattern.permute.xlu0 0
      %1546 = vperm.xlu0 %1545, %v1543
      %v1547 = vpop.permute.xlu0 %1546
      %v1549 = vmul.f32 %v1539, %v1547
      %v1550 = vmul.f32 %v1541, %v1547
      %v1551 = vld [vmem:[%s7] sm:$0xff]
      %1553 = vset.pattern.permute.xlu0 0
      %1554 = vperm.xlu0 %1553, %v1551
      %v1555 = vpop.permute.xlu0 %1554
      %v1557 = vadd.f32 %v1549, %v1555
      %v1558 = vadd.f32 %v1550, %v1555
      %vm1559 = vcmp.ge.f32.partialorder %v1557, 0.0
      %vm1560 = vcmp.ge.f32.partialorder %v1558, 0.0
      %v1561 = vmul.f32 %v1557, 0.01
      %v1562 = vmul.f32 %v1558, 0.01
      %v1563 = vsel %vm1559, %v1557, %v1561
      %v1564 = vsel %vm1560, %v1558, %v1562
      %1565 = vst [vmem:[%s379] sm:$0xff] %v1563
      %1566 = vst [vmem:[%s379 + $0x8] sm:$0xff] %v1564
      %p1567 = scmp.lt.s32.totalorder %s21, 1
      %s1568 = scalar_select %p1567, %s21, 1
      %s1569 = smul.addr %s1568, 2
      %s1570 = smul.addr %s1569, 8
      %s1571 = scalar_lea.vmem %s10, %s1570
      // Predicated region
      $region61: #{up_cbr_forward.1} parent=59 // pred_check
        %p1572 = pneg %p259
      $region62: #{up_cbr_forward.1} parent=59 // pred_check_branch
        %1574 = sbr.rel (%p1572) target = $region64
      $region63: #{up_cbr_forward.1} parent=59 // pred_region
        _
      $region64: #{up_cbr_forward.1} parent=59 // pred_fallthru
        _
    $region60: #{up_cbr_forward.1} parent=5 // pred_fallthru
      _
    %p1575 = scmp.le.s32.totalorder 2, %s16
    // Predicated region
    $region65: #{up_cbr_forward.1} parent=5 // pred_check
      %p1576 = pneg %p1575
    $region66: #{up_cbr_forward.1} parent=5 // pred_check_branch
      %1578 = sbr.rel (%p1576) target = $region68
    $region67: #{up_cbr_forward.1} parent=5 // pred_region
      %s1579 = ssub.s32 %s16, 2
      // Predicated region
      $region69: #{up_cbr_forward.1} parent=67 // pred_check
        %p1580 = pneg %p265
      $region70: #{up_cbr_forward.1} parent=67 // pred_check_branch
        %1582 = sbr.rel (%p1580) target = $region72
      $region71: #{up_cbr_forward.1} parent=67 // pred_region
        %p1583 = scmp.lt.s32.totalorder %s22, 1
        %s1584 = scalar_select %p1583, %s22, 1
        %s1585 = smul.addr %s1584, 2
        %s1586 = smul.addr %s1585, 8
        %s1587 = scalar_lea.vmem %s10, %s1586
      $region72: #{up_cbr_forward.1} parent=67 // pred_fallthru
        _
    $region68: #{up_cbr_forward.1} parent=5 // pred_fallthru
      _
  $region6: #{up_cbr_forward.1} parent=0 // loop_footer
    %s20 = sadd.s32 1, %s16
  $region7: #{up_cbr_forward.1} parent=0 // loop_footer_branch
    %15 = sbr.rel target = $region3
  $region8: #{up_cbr_forward.1} parent=0 // loop_exit
    _

</llo_original>
